<compile_context>
chip_gen: v7x
topology: tpu7x:2x2x1
jax: 0.10.0
libtpu: 0.0.40
codegen_flags: <defaults>
</compile_context>

<pallas_src>
import math

import jax
import jax.numpy as jnp
from jax.experimental import pallas as pl

# ---------------------------------------------------------------------------
# Problem sizes (small, synthetic)
# ---------------------------------------------------------------------------
B = 2            # batch
C = 4            # latent channels
H = W = 16       # latent spatial
S = H * W        # flattened spatial tokens (256 = 2 x 128 lanes)
D = 32           # unet hidden / attention dim
CLIP_DIM = 32    # image embedding dim
NUM_TOKENS = 4   # ip tokens per image
CROSS_DIM = 32   # cross-attention dim of ip tokens
LN_EPS = 1e-5

# ---------------------------------------------------------------------------
# Weight slab layout: every operand starts at lane 0 of its own 8-aligned row
# band (no lane-offset realigns in the kernel).  Single (360, 40) f32 array.
# ---------------------------------------------------------------------------
R_PROJ = 0     # (T*CLIP + T, CROSS) = (132, 32): proj_w token-major rows + proj_b rows
R_WQ   = 136   # (D, D)      wq.T / sqrt(D)   (softmax scale folded)
R_WO   = 168   # (D, D)      wo.T
R_TIME = 200   # (D, D + 1)  time_w.T | time_b
R_WK   = 232   # (CROSS, D)  wk_ip
R_WV   = 264   # (D, CROSS)  wv_ip.T
R_WIN  = 296   # (D, C + 1)  w_in.T | b_in
R_WOUT = 328   # (C, D)      w_out.T
R_BOUT = 336   # (C, 1)      b_out
R_LNG  = 344   # (1, CROSS)  LayerNorm gamma
R_LNB  = 352   # (1, CROSS)  LayerNorm beta
W_ROWS, W_COLS = 360, 40

# ---------------------------------------------------------------------------
# Activation slab layout (one DMA for all per-call inputs): (24, 512) f32.
# ---------------------------------------------------------------------------
A_X   = 0      # (C + 1, B*S) = (5, 512): channel-major latents, lane-fused batch, +ones row
A_IMG = 8      # (B*T, T*CLIP + T) = (8, 132): block-expanded image embeds + one-hot(t) tail
A_TF  = 16     # (B, D + 1) = (2, 33): sinusoidal timestep features + ones column
ACT_ROWS, ACT_COLS = 24, B * S


def pack_weight_slab(p):
    # proj rows: row t*CLIP+e = proj_w[e, t*CROSS:(t+1)*CROSS]; tail rows = proj_b per token
    proj_wb = jnp.concatenate(
        [p["proj_w"].reshape(CLIP_DIM, NUM_TOKENS, CROSS_DIM)
                    .transpose(1, 0, 2)
                    .reshape(NUM_TOKENS * CLIP_DIM, CROSS_DIM),
         p["proj_b"].reshape(NUM_TOKENS, CROSS_DIM)], axis=0)
    time_w_aug = jnp.concatenate([p["time_w"].T, p["time_b"].reshape(D, 1)], axis=1)
    w_in_aug = jnp.concatenate([p["w_in"].T, p["b_in"].reshape(D, 1)], axis=1)

    slab = jnp.zeros((W_ROWS, W_COLS), jnp.float32)
    slab = slab.at[R_PROJ:R_PROJ + NUM_TOKENS * CLIP_DIM + NUM_TOKENS, :CROSS_DIM].set(proj_wb)
    slab = slab.at[R_WQ:R_WQ + D, :D].set(p["wq"].T / math.sqrt(D))
    slab = slab.at[R_WO:R_WO + D, :D].set(p["wo"].T)
    slab = slab.at[R_TIME:R_TIME + D, :D + 1].set(time_w_aug)
    slab = slab.at[R_WK:R_WK + CROSS_DIM, :D].set(p["wk_ip"])
    slab = slab.at[R_WV:R_WV + D, :CROSS_DIM].set(p["wv_ip"].T)
    slab = slab.at[R_WIN:R_WIN + D, :C + 1].set(w_in_aug)
    slab = slab.at[R_WOUT:R_WOUT + C, :D].set(p["w_out"].T)
    slab = slab.at[R_BOUT:R_BOUT + C, :1].set(p["b_out"].reshape(C, 1))
    slab = slab.at[R_LNG:R_LNG + 1, :CROSS_DIM].set(p["ln_g"])
    slab = slab.at[R_LNB:R_LNB + 1, :CROSS_DIM].set(p["ln_b"])
    return slab


def timestep_features(timesteps):
    """Sinusoidal timestep features, row layout (B, D)."""
    half = D // 2
    freqs = jnp.exp(-math.log(10000.0) * jnp.arange(half, dtype=jnp.float32) / half)
    args = timesteps.astype(jnp.float32)[:, None] * freqs[None, :]      # (B, half)
    return jnp.concatenate([jnp.cos(args), jnp.sin(args)], axis=-1)     # (B, D)


def pack_activation_slab(noisy_latents, timesteps, image_embeds):
    # latents: NCHW -> channel-major (C, B*S) with the batch fused along lanes,
    # plus a ones row so b_in is folded into the conv_in matmul.
    x = noisy_latents.reshape(B, C, S).transpose(1, 0, 2).reshape(C, B * S)
    x_aug = jnp.concatenate([x, jnp.ones((1, B * S), jnp.float32)], axis=0)

    # block-expanded image embeddings: row b*T+t carries image_embeds[b] in the
    # t-th CLIP column block plus a one-hot(t) tail (folds proj_b into the matmul),
    # so the kernel's projection matmul emits tokens directly in (B*T, CROSS) rows.
    img_rep = jnp.repeat(image_embeds.astype(jnp.float32), NUM_TOKENS, axis=0)   # (B*T, CLIP)
    sel = jnp.tile(jnp.eye(NUM_TOKENS, dtype=jnp.float32), (B, 1))               # (B*T, T)
    img_blk = jnp.concatenate(
        [(sel[:, :, None] * img_rep[:, None, :]).reshape(B * NUM_TOKENS,
                                                         NUM_TOKENS * CLIP_DIM),
         sel], axis=1)                                                           # (B*T, T*CLIP+T)

    # timestep features as rows, plus a ones column so time_b is folded in.
    tfeat = timestep_features(timesteps)                                         # (B, D)
    tfeat_aug = jnp.concatenate([tfeat, jnp.ones((B, 1), jnp.float32)], axis=1)  # (B, D+1)

    act = jnp.zeros((ACT_ROWS, ACT_COLS), jnp.float32)
    act = act.at[A_X:A_X + C + 1, :].set(x_aug)
    act = act.at[A_IMG:A_IMG + B * NUM_TOKENS,
                 :NUM_TOKENS * CLIP_DIM + NUM_TOKENS].set(img_blk)
    act = act.at[A_TF:A_TF + B, :D + 1].set(tfeat_aug)
    return act


# ---------------------------------------------------------------------------
# The fused kernel: image_proj_model + timestep MLP + synthetic UNet step.
# Activations are channel-major; the batch is fused along the lane (N) axis for
# the whole shared-weight matmul chain; output is one full (8, 256) tile.
# ---------------------------------------------------------------------------
def ip_adapter_fused_kernel(act_ref, w_ref, out_ref):
    f32 = jnp.float32

    # ---- weights: loaded once from lane-0 aligned row bands of the slab
    proj_wb = w_ref[R_PROJ:R_PROJ + NUM_TOKENS * CLIP_DIM + NUM_TOKENS, :CROSS_DIM]
    wq_t    = w_ref[R_WQ:R_WQ + D, :D]              # 1/sqrt(D) pre-folded
    wo_t    = w_ref[R_WO:R_WO + D, :D]
    time_wa = w_ref[R_TIME:R_TIME + D, :D + 1]      # time_w.T | time_b
    wk      = w_ref[R_WK:R_WK + CROSS_DIM, :D]
    wv_t    = w_ref[R_WV:R_WV + D, :CROSS_DIM]
    w_in_a  = w_ref[R_WIN:R_WIN + D, :C + 1]        # w_in.T | b_in
    w_out_t = w_ref[R_WOUT:R_WOUT + C, :D]
    b_out   = w_ref[R_BOUT:R_BOUT + C, :1]
    ln_g    = w_ref[R_LNG:R_LNG + 1, :CROSS_DIM]
    ln_b    = w_ref[R_LNB:R_LNB + 1, :CROSS_DIM]

    # ---- activations
    x_aug   = act_ref[A_X:A_X + C + 1, :]                                    # (C+1, B*S)
    img_blk = act_ref[A_IMG:A_IMG + B * NUM_TOKENS,
                      :NUM_TOKENS * CLIP_DIM + NUM_TOKENS]                   # (B*T, T*CLIP+T)
    tfeat_a = act_ref[A_TF:A_TF + B, :D + 1]                                 # (B, D+1)

    # ---- image_proj_model: Linear (bias folded) directly in token-row layout + LayerNorm
    z = jnp.dot(img_blk, proj_wb, preferred_element_type=f32)                # (B*T, CROSS)
    mu = jnp.mean(z, axis=-1, keepdims=True)
    var = jnp.mean((z - mu) ** 2, axis=-1, keepdims=True)
    ip = (z - mu) * jax.lax.rsqrt(var + LN_EPS) * ln_g + ln_b                # (B*T, CROSS)

    # ---- adapter to_k_ip / to_v_ip for both batch items at once (hoisted out of loop)
    k_all = jnp.dot(ip, wk, preferred_element_type=f32)                      # (B*T, D)
    vt_all = jax.lax.dot_general(wv_t, ip, (((1,), (1,)), ((), ())),
                                 preferred_element_type=f32)                 # (D, B*T) == v^T

    # ---- timestep MLP (time_b folded via ones column), silu
    tv = jax.lax.dot_general(time_wa, tfeat_a, (((1,), (1,)), ((), ())),
                             preferred_element_type=f32)                     # (D, B)
    temb = tv * (1.0 / (1.0 + jnp.exp(-tv)))                                 # (D, B)

    # ---- conv_in (1x1) over the lane-fused batch (b_in folded), + timestep conditioning
    h = jnp.dot(w_in_a, x_aug, preferred_element_type=f32)                   # (D, B*S)
    h = h + jnp.concatenate([jnp.broadcast_to(temb[:, 0:1], (D, S)),
                             jnp.broadcast_to(temb[:, 1:2], (D, S))], axis=1)

    # ---- q projection once over N = B*S (softmax scale already inside wq_t)
    q = jnp.dot(wq_t, h, preferred_element_type=f32)                         # (D, B*S)

    # ---- per-batch scores / softmax / attention readout (MXU + XLU + EUP)
    attn_halves = []
    for b in range(B):  # B == 2, statically unrolled
        qb = q[:, b * S:(b + 1) * S]                                         # (D, S), 128-aligned
        kb = k_all[b * NUM_TOKENS:(b + 1) * NUM_TOKENS, :]                   # (T, D)
        vtb = vt_all[:, b * NUM_TOKENS:(b + 1) * NUM_TOKENS]                 # (D, T)
        s = jnp.dot(kb, qb, preferred_element_type=f32)                      # (T, S)
        m = jnp.max(s, axis=0, keepdims=True)                                # (1, S)
        e = jnp.exp(s - m)                                                   # (T, S)
        inv = pl.reciprocal(jnp.sum(e, axis=0, keepdims=True), approx=True)  # (1, S)
        attn_halves.append(jnp.dot(vtb, e * inv,
                                   preferred_element_type=f32))              # (D, S)
    attn = jnp.concatenate(attn_halves, axis=1)                              # (D, B*S)

    # ---- output projection of the attention + conv_out (1x1), batch still lane-fused
    h = h + jnp.dot(wo_t, attn, preferred_element_type=f32)                  # (D, B*S)
    out = jnp.dot(w_out_t, h, preferred_element_type=f32) + b_out            # (C, B*S)

    # ---- restack to (B*C, S): one full (8, 256) unmasked store
    out_ref[...] = jnp.concatenate([out[:, 0:S], out[:, S:2 * S]],
                                   axis=0).astype(out_ref.dtype)


# ---------------------------------------------------------------------------
# Wrapper (one jitted dispatch: tiny input prep + single pallas_call)
# ---------------------------------------------------------------------------
@jax.jit
def ip_adapter_forward(noisy_latents, timesteps, image_embeds, wslab):
    """Mirrors IPAdapter.forward(noisy_latents, timesteps, image_embeds)."""
    act = pack_activation_slab(noisy_latents, timesteps, image_embeds)
    out = pl.pallas_call(
        ip_adapter_fused_kernel,
        out_shape=jax.ShapeDtypeStruct((B * C, S), jnp.float32),
        # no grid: single invocation, everything resident in VMEM (<300 KiB total).
        # On v7x a grid=(B,) "parallel" variant could use both TensorCores, but it
        # conflicts with the lane-axis batch fusion and the kernel is launch-bound.
    )(act, wslab)
    return out.reshape(B, C, H, W)                 # (B*C, S) -> NCHW: pure reshape


# ---------------------------------------------------------------------------
# Parameters + plain-JAX reference (row-major formulation, same math)
# ---------------------------------------------------------------------------
def init_params(key):
    ks = jax.random.split(key, 12)
    n = lambda k, shape, scale: (scale * jax.random.normal(k, shape)).astype(jnp.float32)
    return {
        # image_proj_model
        "proj_w": n(ks[0], (CLIP_DIM, NUM_TOKENS * CROSS_DIM), 0.05),
        "proj_b": n(ks[1], (1, NUM_TOKENS * CROSS_DIM), 0.02),
        "ln_g": jnp.ones((1, CROSS_DIM), jnp.float32),
        "ln_b": jnp.zeros((1, CROSS_DIM), jnp.float32),
        # unet conv_in / conv_out (1x1 convs)
        "w_in": n(ks[2], (C, D), 0.2),
        "b_in": n(ks[3], (1, D), 0.02),
        "w_out": n(ks[4], (D, C), 0.1),
        "b_out": n(ks[5], (1, C), 0.02),
        # attention + adapter_modules (to_k_ip / to_v_ip)
        "wq": n(ks[6], (D, D), 0.1),
        "wk_ip": n(ks[7], (CROSS_DIM, D), 0.1),
        "wv_ip": n(ks[8], (CROSS_DIM, D), 0.1),
        "wo": n(ks[9], (D, D), 0.1),
        # timestep MLP
        "time_w": n(ks[10], (D, D), 0.1),
        "time_b": n(ks[11], (D,), 0.02),
    }


def reference_forward(noisy_latents, timesteps, image_embeds, p):
    # image_proj_model
    z = image_embeds @ p["proj_w"] + p["proj_b"]
    z = z.reshape(B, NUM_TOKENS, CROSS_DIM)
    mu = z.mean(-1, keepdims=True)
    var = ((z - mu) ** 2).mean(-1, keepdims=True)
    ip = (z - mu) / jnp.sqrt(var + LN_EPS) * p["ln_g"] + p["ln_b"]
    # timestep embedding
    half = D // 2
    freqs = jnp.exp(-math.log(10000.0) * jnp.arange(half, dtype=jnp.float32) / half)
    args = timesteps.astype(jnp.float32)[:, None] * freqs[None, :]
    emb = jnp.concatenate([jnp.cos(args), jnp.sin(args)], axis=-1)
    temb = jax.nn.silu(emb @ p["time_w"] + p["time_b"])                # (B, D)
    # synthetic UNet step
    x = noisy_latents.transpose(0, 2, 3, 1).reshape(B, S, C)
    h = x @ p["w_in"] + p["b_in"] + temb[:, None, :]
    q = h @ p["wq"]
    k = ip @ p["wk_ip"]
    v = ip @ p["wv_ip"]
    s = jnp.einsum("bsd,btd->bst", q, k) / math.sqrt(D)
    pr = jax.nn.softmax(s, axis=-1)
    a = jnp.einsum("bst,btd->bsd", pr, v)
    h = h + a @ p["wo"]
    out = h @ p["w_out"] + p["b_out"]
    return out.reshape(B, H, W, C).transpose(0, 3, 1, 2)


if __name__ == "__main__":
    key = jax.random.PRNGKey(0)
    k0, k1, k2 = jax.random.split(key, 3)

    params = init_params(k0)
    wslab = pack_weight_slab(params)

    noisy_latents = jax.random.normal(k1, (B, C, H, W), dtype=jnp.float32)
    image_embeds = jax.random.normal(k2, (B, CLIP_DIM), dtype=jnp.float32)
    timesteps = jnp.array([17, 503], dtype=jnp.int32)

    noise_pred = ip_adapter_forward(noisy_latents, timesteps, image_embeds, wslab)
    noise_pred = jax.block_until_ready(noise_pred)

    assert noise_pred.shape == (B, C, H, W)
    assert bool(jnp.all(jnp.isfinite(noise_pred)))

    # sanity check against a plain-JAX reference of the same synthetic forward
    ref = reference_forward(noisy_latents, timesteps, image_embeds, params)
    max_err = float(jnp.max(jnp.abs(noise_pred - ref)))
    assert max_err < 5e-3, f"mismatch vs reference: max |err| = {max_err}"

    print("KERNEL_OK")
</pallas_src>

<mosaic_0001>
module attributes {stable_mosaic.version = 11 : i64} {
  func.func @ip_adapter_fused_kernel(%arg0: memref<24x512xf32, #tpu.memory_space<vmem>>, %arg1: memref<360x40xf32, #tpu.memory_space<vmem>>, %arg2: memref<8x256xf32, #tpu.memory_space<vmem>>) attributes {dimension_semantics = [], scalar_prefetch = 0 : i64, scratch_operands = 0 : i64, tpu.core_type = #tpu.core_type<tc>} {
    %c0 = arith.constant 0 : index
    %c0_0 = arith.constant 0 : index
    %0 = vector.load %arg1[%c0, %c0_0] : memref<360x40xf32, #tpu.memory_space<vmem>>, vector<132x32xf32>
    %c136 = arith.constant 136 : index
    %c0_1 = arith.constant 0 : index
    %1 = vector.load %arg1[%c136, %c0_1] : memref<360x40xf32, #tpu.memory_space<vmem>>, vector<32x32xf32>
    %c168 = arith.constant 168 : index
    %c0_2 = arith.constant 0 : index
    %2 = vector.load %arg1[%c168, %c0_2] : memref<360x40xf32, #tpu.memory_space<vmem>>, vector<32x32xf32>
    %c200 = arith.constant 200 : index
    %c0_3 = arith.constant 0 : index
    %3 = vector.load %arg1[%c200, %c0_3] : memref<360x40xf32, #tpu.memory_space<vmem>>, vector<32x33xf32>
    %c232 = arith.constant 232 : index
    %c0_4 = arith.constant 0 : index
    %4 = vector.load %arg1[%c232, %c0_4] : memref<360x40xf32, #tpu.memory_space<vmem>>, vector<32x32xf32>
    %c264 = arith.constant 264 : index
    %c0_5 = arith.constant 0 : index
    %5 = vector.load %arg1[%c264, %c0_5] : memref<360x40xf32, #tpu.memory_space<vmem>>, vector<32x32xf32>
    %c296 = arith.constant 296 : index
    %c0_6 = arith.constant 0 : index
    %6 = vector.load %arg1[%c296, %c0_6] : memref<360x40xf32, #tpu.memory_space<vmem>>, vector<32x5xf32>
    %c328 = arith.constant 328 : index
    %c0_7 = arith.constant 0 : index
    %7 = vector.load %arg1[%c328, %c0_7] : memref<360x40xf32, #tpu.memory_space<vmem>>, vector<4x32xf32>
    %c336 = arith.constant 336 : index
    %c0_8 = arith.constant 0 : index
    %8 = vector.load %arg1[%c336, %c0_8] : memref<360x40xf32, #tpu.memory_space<vmem>>, vector<4x1xf32>
    %c344 = arith.constant 344 : index
    %c0_9 = arith.constant 0 : index
    %9 = vector.load %arg1[%c344, %c0_9] : memref<360x40xf32, #tpu.memory_space<vmem>>, vector<1x32xf32>
    %c352 = arith.constant 352 : index
    %c0_10 = arith.constant 0 : index
    %10 = vector.load %arg1[%c352, %c0_10] : memref<360x40xf32, #tpu.memory_space<vmem>>, vector<1x32xf32>
    %c0_11 = arith.constant 0 : index
    %c0_12 = arith.constant 0 : index
    %11 = vector.load %arg0[%c0_11, %c0_12] : memref<24x512xf32, #tpu.memory_space<vmem>>, vector<5x512xf32>
    %c8 = arith.constant 8 : index
    %c0_13 = arith.constant 0 : index
    %12 = vector.load %arg0[%c8, %c0_13] : memref<24x512xf32, #tpu.memory_space<vmem>>, vector<8x132xf32>
    %c16 = arith.constant 16 : index
    %c0_14 = arith.constant 0 : index
    %13 = vector.load %arg0[%c16, %c0_14] : memref<24x512xf32, #tpu.memory_space<vmem>>, vector<2x33xf32>
    %cst = arith.constant dense<0.000000e+00> : vector<8x32xf32>
    %14 = tpu.matmul %12, %0, %cst {dimension_numbers = #tpu.dot_dimension_numbers<[1], [0], [0], [1], [0, 0, 1, 1], [], []>} : vector<8x132xf32>, vector<132x32xf32>, vector<8x32xf32> -> vector<8x32xf32>
    %cst_15 = arith.constant dense<0.000000e+00> : vector<8xf32>
    %15 = vector.multi_reduction <add>, %14, %cst_15 [1] : vector<8x32xf32> to vector<8xf32>
    %16 = vector.shape_cast %15 : vector<8xf32> to vector<8x1xf32>
    %cst_16 = arith.constant 3.200000e+01 : f32
    %17 = vector.broadcast %cst_16 : f32 to vector<8x1xf32>
    %18 = arith.divf %16, %17 : vector<8x1xf32>
    %19 = vector.broadcast %18 : vector<8x1xf32> to vector<8x32xf32>
    %20 = arith.subf %14, %19 : vector<8x32xf32>
    %21 = arith.mulf %20, %20 : vector<8x32xf32>
    %cst_17 = arith.constant dense<0.000000e+00> : vector<8xf32>
    %22 = vector.multi_reduction <add>, %21, %cst_17 [1] : vector<8x32xf32> to vector<8xf32>
    %23 = vector.shape_cast %22 : vector<8xf32> to vector<8x1xf32>
    %cst_18 = arith.constant 3.200000e+01 : f32
    %24 = vector.broadcast %cst_18 : f32 to vector<8x1xf32>
    %25 = arith.divf %23, %24 : vector<8x1xf32>
    %26 = vector.broadcast %18 : vector<8x1xf32> to vector<8x32xf32>
    %27 = arith.subf %14, %26 : vector<8x32xf32>
    %cst_19 = arith.constant 9.99999974E-6 : f32
    %28 = vector.broadcast %cst_19 : f32 to vector<8x1xf32>
    %29 = arith.addf %25, %28 : vector<8x1xf32>
    %30 = math.rsqrt %29 : vector<8x1xf32>
    %31 = vector.broadcast %30 : vector<8x1xf32> to vector<8x32xf32>
    %32 = arith.mulf %27, %31 : vector<8x32xf32>
    %33 = vector.broadcast %9 : vector<1x32xf32> to vector<8x32xf32>
    %34 = arith.mulf %32, %33 : vector<8x32xf32>
    %35 = vector.broadcast %10 : vector<1x32xf32> to vector<8x32xf32>
    %36 = arith.addf %34, %35 : vector<8x32xf32>
    %cst_20 = arith.constant dense<0.000000e+00> : vector<8x32xf32>
    %37 = tpu.matmul %36, %4, %cst_20 {dimension_numbers = #tpu.dot_dimension_numbers<[1], [0], [0], [1], [0, 0, 1, 1], [], []>} : vector<8x32xf32>, vector<32x32xf32>, vector<8x32xf32> -> vector<8x32xf32>
    %cst_21 = arith.constant dense<0.000000e+00> : vector<32x8xf32>
    %38 = tpu.matmul %5, %36, %cst_21 {dimension_numbers = #tpu.dot_dimension_numbers<[1], [1], [0], [0], [0, 0, 1, 0], [], []>} : vector<32x32xf32>, vector<8x32xf32>, vector<32x8xf32> -> vector<32x8xf32>
    %cst_22 = arith.constant dense<0.000000e+00> : vector<32x2xf32>
    %39 = tpu.matmul %3, %13, %cst_22 {dimension_numbers = #tpu.dot_dimension_numbers<[1], [1], [0], [0], [0, 0, 1, 0], [], []>} : vector<32x33xf32>, vector<2x33xf32>, vector<32x2xf32> -> vector<32x2xf32>
    %cst_23 = arith.constant 0.000000e+00 : f32
    %40 = vector.broadcast %cst_23 : f32 to vector<32x2xf32>
    %41 = arith.subf %40, %39 : vector<32x2xf32>
    %42 = math.exp %41 : vector<32x2xf32>
    %cst_24 = arith.constant 1.000000e+00 : f32
    %43 = vector.broadcast %cst_24 : f32 to vector<32x2xf32>
    %44 = arith.addf %43, %42 : vector<32x2xf32>
    %cst_25 = arith.constant 1.000000e+00 : f32
    %45 = vector.broadcast %cst_25 : f32 to vector<32x2xf32>
    %46 = arith.divf %45, %44 : vector<32x2xf32>
    %47 = arith.mulf %39, %46 : vector<32x2xf32>
    %cst_26 = arith.constant dense<0.000000e+00> : vector<32x512xf32>
    %48 = tpu.matmul %6, %11, %cst_26 {dimension_numbers = #tpu.dot_dimension_numbers<[1], [0], [0], [1], [0, 0, 1, 1], [], []>} : vector<32x5xf32>, vector<5x512xf32>, vector<32x512xf32> -> vector<32x512xf32>
    %49 = vector.extract_strided_slice %47 {offsets = [0, 0], sizes = [32, 1], strides = [1, 1]} : vector<32x2xf32> to vector<32x1xf32>
    %50 = vector.shape_cast %49 : vector<32x1xf32> to vector<32x1xf32>
    %51 = vector.broadcast %50 : vector<32x1xf32> to vector<32x256xf32>
    %52 = vector.extract_strided_slice %47 {offsets = [0, 1], sizes = [32, 1], strides = [1, 1]} : vector<32x2xf32> to vector<32x1xf32>
    %53 = vector.shape_cast %52 : vector<32x1xf32> to vector<32x1xf32>
    %54 = vector.broadcast %53 : vector<32x1xf32> to vector<32x256xf32>
    %55 = tpu.concatenate %51, %54 in 1 : vector<32x256xf32>, vector<32x256xf32> -> vector<32x512xf32>
    %56 = arith.addf %48, %55 : vector<32x512xf32>
    %cst_27 = arith.constant dense<0.000000e+00> : vector<32x512xf32>
    %57 = tpu.matmul %1, %56, %cst_27 {dimension_numbers = #tpu.dot_dimension_numbers<[1], [0], [0], [1], [0, 0, 1, 1], [], []>} : vector<32x32xf32>, vector<32x512xf32>, vector<32x512xf32> -> vector<32x512xf32>
    %58 = vector.extract_strided_slice %57 {offsets = [0, 0], sizes = [32, 256], strides = [1, 1]} : vector<32x512xf32> to vector<32x256xf32>
    %59 = vector.extract_strided_slice %37 {offsets = [0, 0], sizes = [4, 32], strides = [1, 1]} : vector<8x32xf32> to vector<4x32xf32>
    %60 = vector.extract_strided_slice %38 {offsets = [0, 0], sizes = [32, 4], strides = [1, 1]} : vector<32x8xf32> to vector<32x4xf32>
    %cst_28 = arith.constant dense<0.000000e+00> : vector<4x256xf32>
    %61 = tpu.matmul %59, %58, %cst_28 {dimension_numbers = #tpu.dot_dimension_numbers<[1], [0], [0], [1], [0, 0, 1, 1], [], []>} : vector<4x32xf32>, vector<32x256xf32>, vector<4x256xf32> -> vector<4x256xf32>
    %cst_29 = arith.constant dense<0xFF800000> : vector<256xf32>
    %62 = vector.multi_reduction <maximumf>, %61, %cst_29 [0] : vector<4x256xf32> to vector<256xf32>
    %63 = vector.shape_cast %62 : vector<256xf32> to vector<1x256xf32>
    %64 = vector.broadcast %63 : vector<1x256xf32> to vector<4x256xf32>
    %65 = arith.subf %61, %64 : vector<4x256xf32>
    %66 = math.exp %65 : vector<4x256xf32>
    %cst_30 = arith.constant dense<0.000000e+00> : vector<256xf32>
    %67 = vector.multi_reduction <add>, %66, %cst_30 [0] : vector<4x256xf32> to vector<256xf32>
    %68 = vector.shape_cast %67 : vector<256xf32> to vector<1x256xf32>
    %69 = tpu.reciprocal %68 {approx = true} : vector<1x256xf32> -> vector<1x256xf32>
    %70 = vector.broadcast %69 : vector<1x256xf32> to vector<4x256xf32>
    %71 = arith.mulf %66, %70 : vector<4x256xf32>
    %cst_31 = arith.constant dense<0.000000e+00> : vector<32x256xf32>
    %72 = tpu.matmul %60, %71, %cst_31 {dimension_numbers = #tpu.dot_dimension_numbers<[1], [0], [0], [1], [0, 0, 1, 1], [], []>} : vector<32x4xf32>, vector<4x256xf32>, vector<32x256xf32> -> vector<32x256xf32>
    %73 = vector.extract_strided_slice %57 {offsets = [0, 256], sizes = [32, 256], strides = [1, 1]} : vector<32x512xf32> to vector<32x256xf32>
    %74 = vector.extract_strided_slice %37 {offsets = [4, 0], sizes = [4, 32], strides = [1, 1]} : vector<8x32xf32> to vector<4x32xf32>
    %75 = vector.extract_strided_slice %38 {offsets = [0, 4], sizes = [32, 4], strides = [1, 1]} : vector<32x8xf32> to vector<32x4xf32>
    %cst_32 = arith.constant dense<0.000000e+00> : vector<4x256xf32>
    %76 = tpu.matmul %74, %73, %cst_32 {dimension_numbers = #tpu.dot_dimension_numbers<[1], [0], [0], [1], [0, 0, 1, 1], [], []>} : vector<4x32xf32>, vector<32x256xf32>, vector<4x256xf32> -> vector<4x256xf32>
    %cst_33 = arith.constant dense<0xFF800000> : vector<256xf32>
    %77 = vector.multi_reduction <maximumf>, %76, %cst_33 [0] : vector<4x256xf32> to vector<256xf32>
    %78 = vector.shape_cast %77 : vector<256xf32> to vector<1x256xf32>
    %79 = vector.broadcast %78 : vector<1x256xf32> to vector<4x256xf32>
    %80 = arith.subf %76, %79 : vector<4x256xf32>
    %81 = math.exp %80 : vector<4x256xf32>
    %cst_34 = arith.constant dense<0.000000e+00> : vector<256xf32>
    %82 = vector.multi_reduction <add>, %81, %cst_34 [0] : vector<4x256xf32> to vector<256xf32>
    %83 = vector.shape_cast %82 : vector<256xf32> to vector<1x256xf32>
    %84 = tpu.reciprocal %83 {approx = true} : vector<1x256xf32> -> vector<1x256xf32>
    %85 = vector.broadcast %84 : vector<1x256xf32> to vector<4x256xf32>
    %86 = arith.mulf %81, %85 : vector<4x256xf32>
    %cst_35 = arith.constant dense<0.000000e+00> : vector<32x256xf32>
    %87 = tpu.matmul %75, %86, %cst_35 {dimension_numbers = #tpu.dot_dimension_numbers<[1], [0], [0], [1], [0, 0, 1, 1], [], []>} : vector<32x4xf32>, vector<4x256xf32>, vector<32x256xf32> -> vector<32x256xf32>
    %88 = tpu.concatenate %72, %87 in 1 : vector<32x256xf32>, vector<32x256xf32> -> vector<32x512xf32>
    %cst_36 = arith.constant dense<0.000000e+00> : vector<32x512xf32>
    %89 = tpu.matmul %2, %88, %cst_36 {dimension_numbers = #tpu.dot_dimension_numbers<[1], [0], [0], [1], [0, 0, 1, 1], [], []>} : vector<32x32xf32>, vector<32x512xf32>, vector<32x512xf32> -> vector<32x512xf32>
    %90 = arith.addf %56, %89 : vector<32x512xf32>
    %cst_37 = arith.constant dense<0.000000e+00> : vector<4x512xf32>
    %91 = tpu.matmul %7, %90, %cst_37 {dimension_numbers = #tpu.dot_dimension_numbers<[1], [0], [0], [1], [0, 0, 1, 1], [], []>} : vector<4x32xf32>, vector<32x512xf32>, vector<4x512xf32> -> vector<4x512xf32>
    %92 = vector.broadcast %8 : vector<4x1xf32> to vector<4x512xf32>
    %93 = arith.addf %91, %92 : vector<4x512xf32>
    %94 = vector.extract_strided_slice %93 {offsets = [0, 0], sizes = [4, 256], strides = [1, 1]} : vector<4x512xf32> to vector<4x256xf32>
    %95 = vector.extract_strided_slice %93 {offsets = [0, 256], sizes = [4, 256], strides = [1, 1]} : vector<4x512xf32> to vector<4x256xf32>
    %96 = tpu.concatenate %94, %95 in 0 : vector<4x256xf32>, vector<4x256xf32> -> vector<8x256xf32>
    %c0_38 = arith.constant 0 : index
    %c0_39 = arith.constant 0 : index
    %97 = vector.load %arg2[%c0_38, %c0_39] : memref<8x256xf32, #tpu.memory_space<vmem>>, vector<8x256xf32>
    tpu.vector_store %arg2[%c0_38, %c0_39], %96 {strides = array<i32>} : memref<8x256xf32, #tpu.memory_space<vmem>>, vector<8x256xf32>,
    return
  }
}

</mosaic_0001>

<llo_original>
// kernel: ip_adapter_forward.1
$region0: #{ip_adapter_forward.1}
  #allocation0 [shape = 'u32[]', space=smem, size = 0x4, offset = 0x4, fixed_abs, tag = 'smem constant byte address 0x4 - core index']
  #allocation1 [shape = 'u32[144,128]{1,0:T(1,128)}', space=vmem, size = 0x12000, scoped, tag = 'internal scratch']
  %s0 = inlined_call_operand.vmem [shape: f32[24,512], index: 0, kind: input, shape index: {}]
  %s1 = inlined_call_operand.vmem [shape: f32[360,40], index: 1, kind: input, shape index: {}]
  %s2 = inlined_call_operand.vmem [shape: f32[8,256], index: 2, kind: output, shape index: {}]
  %s3 = sld [smem:[#allocation0]]
  $region18: #{ip_adapter_forward.1} parent=0
    _
  %s5 = ssub.s32 1, %s3
  %s6 = scalar_select 0, %s5, %s3
  // Predicated region
  $region2: #{ip_adapter_forward.1} parent=0 // pred_check
    _
  $region3: #{ip_adapter_forward.1} parent=0 // pred_check_branch
    %8 = sbr.rel (0) target = $region5
  $region4: #{ip_adapter_forward.1} parent=0 // pred_region
    _
  $region5: #{ip_adapter_forward.1} parent=0 // pred_fallthru
    _
  // Predicated region
  $region6: #{ip_adapter_forward.1} parent=0 // pred_check
    _
  $region7: #{ip_adapter_forward.1} parent=0 // pred_check_branch
    %10 = sbr.rel (0) target = $region9
  $region8: #{ip_adapter_forward.1} parent=0 // pred_region
    _
  $region9: #{ip_adapter_forward.1} parent=0 // pred_fallthru
    _
  %v11 = vld [vmem:[%s1] sm:$0xff]
  %v12 = vld [vmem:[%s1 + $0x8] sm:$0xff]
  %v13 = vld [vmem:[%s1 + $0x10] sm:$0xff]
  %v14 = vld [vmem:[%s1 + $0x18] sm:$0xff]
  %v15 = vld [vmem:[%s1 + $0x20] sm:$0xff]
  %v16 = vld [vmem:[%s1 + $0x28] sm:$0xff]
  %v17 = vld [vmem:[%s1 + $0x30] sm:$0xff]
  %v18 = vld [vmem:[%s1 + $0x38] sm:$0xff]
  %v19 = vld [vmem:[%s1 + $0x40] sm:$0xff]
  %v20 = vld [vmem:[%s1 + $0x48] sm:$0xff]
  %v21 = vld [vmem:[%s1 + $0x50] sm:$0xff]
  %v22 = vld [vmem:[%s1 + $0x58] sm:$0xff]
  %v23 = vld [vmem:[%s1 + $0x60] sm:$0xff]
  %v24 = vld [vmem:[%s1 + $0x68] sm:$0xff]
  %v25 = vld [vmem:[%s1 + $0x70] sm:$0xff]
  %v26 = vld [vmem:[%s1 + $0x78] sm:$0xff]
  %v27 = vld [vmem:[%s1 + $0x80] sm:$0xf]
  %v28 = vld [vmem:[%s1 + $0x88] sm:$0xff]
  %v29 = vld [vmem:[%s1 + $0x90] sm:$0xff]
  %v30 = vld [vmem:[%s1 + $0x98] sm:$0xff]
  %v31 = vld [vmem:[%s1 + $0xa0] sm:$0xff]
  %v32 = vld [vmem:[%s1 + $0xa8] sm:$0xff]
  %v33 = vld [vmem:[%s1 + $0xb0] sm:$0xff]
  %v34 = vld [vmem:[%s1 + $0xb8] sm:$0xff]
  %v35 = vld [vmem:[%s1 + $0xc0] sm:$0xff]
  %v36 = vld [vmem:[%s1 + $0xc8] sm:$0xff]
  %v37 = vld [vmem:[%s1 + $0xd0] sm:$0xff]
  %v38 = vld [vmem:[%s1 + $0xd8] sm:$0xff]
  %v39 = vld [vmem:[%s1 + $0xe0] sm:$0xff]
  %v40 = vld [vmem:[%s1 + $0xe8] sm:$0xff]
  %v41 = vld [vmem:[%s1 + $0xf0] sm:$0xff]
  %v42 = vld [vmem:[%s1 + $0xf8] sm:$0xff]
  %v43 = vld [vmem:[%s1 + $0x100] sm:$0xff]
  %v44 = vld [vmem:[%s1 + $0x108] sm:$0xff]
  %v45 = vld [vmem:[%s1 + $0x110] sm:$0xff]
  %v46 = vld [vmem:[%s1 + $0x118] sm:$0xff]
  %v47 = vld [vmem:[%s1 + $0x120] sm:$0xff]
  %v48 = vld [vmem:[%s1 + $0x128] sm:$0xff]
  %v49 = vld [vmem:[%s1 + $0x130] sm:$0xff]
  %v50 = vld [vmem:[%s1 + $0x138] sm:$0xff]
  %v51 = vld [vmem:[%s1 + $0x140] sm:$0xff]
  %v52 = vld [vmem:[%s1 + $0x148] sm:$0xf]
  %v53 = vld [vmem:[%s1 + $0x150] sm:$0xf]
  %v54 = vld [vmem:[%s1 + $0x158] sm:$0x1]
  %v55 = vld [vmem:[%s1 + $0x160] sm:$0x1]
  %v56 = vld [vmem:[%s0] sm:$0x1f]
  %v57 = vld [vmem:[%s0 + $0x8] sm:$0x1f]
  %v58 = vld [vmem:[%s0 + $0x10] sm:$0x1f]
  %v59 = vld [vmem:[%s0 + $0x18] sm:$0x1f]
  %v60 = vld [vmem:[%s0 + $0x20] sm:$0xff]
  %v61 = vld [vmem:[%s0 + $0x28] sm:$0xff]
  %v62 = vld [vmem:[%s0 + $0x40] sm:$0x3]
  %vm63 = vcmask 31744
  %v65 = vsel %vm63, %v61, 0
  %vm67 = vcmask 1043456
  %v69 = vsel %vm67, %v27, 0
  %71 = vmatprep.subr.mxu0 0.0
  %72 = vmatpush1.msra.mxu0 %v11
  %73 = vmatprep.subr.mxu0 0.0
  %74 = vmatpush1.msra.mxu0 %v12
  %75 = vmatprep.subr.mxu0 0.0
  %76 = vmatpush1.msra.mxu0 %v13
  %77 = vmatprep.subr.mxu0 0.0
  %78 = vmatpush1.msra.mxu0 %v14
  %79 = vmatprep.subr.mxu0 0.0
  %80 = vmatpush1.msra.mxu0 %v15
  %81 = vmatprep.subr.mxu0 0.0
  %82 = vmatpush1.msra.mxu0 %v16
  %83 = vmatprep.subr.mxu0 0.0
  %84 = vmatpush1.msra.mxu0 %v17
  %85 = vmatprep.subr.mxu0 0.0
  %86 = vmatpush1.msra.mxu0 %v18
  %87 = vmatprep.subr.mxu0 0.0
  %88 = vmatpush1.msra.mxu0 %v19
  %89 = vmatprep.subr.mxu0 0.0
  %90 = vmatpush1.msra.mxu0 %v20
  %91 = vmatprep.subr.mxu0 0.0
  %92 = vmatpush1.msra.mxu0 %v21
  %93 = vmatprep.subr.mxu0 0.0
  %94 = vmatpush1.msra.mxu0 %v22
  %95 = vmatprep.subr.mxu0 0.0
  %96 = vmatpush1.msra.mxu0 %v23
  %97 = vmatprep.subr.mxu0 0.0
  %98 = vmatpush1.msra.mxu0 %v24
  %99 = vmatprep.subr.mxu0 0.0
  %100 = vmatpush1.msra.mxu0 %v25
  %101 = vmatprep.subr.mxu0 0.0
  %102 = vmatpush1.msra.mxu0 %v26
  %103 = vmatprep.subr.mxu0 0.0
  %104 = vmatpush1.msra.mxu0 %v69
  %105 = vmatprep.subr.mxu0 0.0
  %106 = vmatpush1.msra.mxu0 0.0
  %107 = vmatprep.subr.mxu0 0.0
  %108 = vmatpush1.msra.mxu0 0.0
  %109 = vmatprep.subr.mxu0 0.0
  %110 = vmatpush1.msra.mxu0 0.0
  %111 = vmatprep.subr.mxu0 0.0
  %112 = vmatpush1.msra.mxu0 0.0
  %113 = vmatprep.subr.mxu0 0.0
  %114 = vmatpush1.msra.mxu0 0.0
  %115 = vmatprep.subr.mxu0 0.0
  %116 = vmatpush1.msra.mxu0 0.0
  %117 = vmatprep.subr.mxu0 0.0
  %118 = vmatpush1.msra.mxu0 0.0
  %119 = vmatprep.subr.mxu0 0.0
  %120 = vmatpush1.msra.mxu0 0.0
  %121 = vmatprep.subr.mxu0 0.0
  %122 = vmatpush1.msra.mxu0 0.0
  %123 = vmatprep.subr.mxu0 0.0
  %124 = vmatpush1.msra.mxu0 0.0
  %125 = vmatprep.subr.mxu0 0.0
  %126 = vmatpush1.msra.mxu0 0.0
  %127 = vmatprep.subr.mxu0 0.0
  %128 = vmatpush1.msra.mxu0 0.0
  %129 = vmatprep.subr.mxu0 0.0
  %130 = vmatpush1.msra.mxu0 0.0
  %131 = vmatprep.subr.mxu0 0.0
  %132 = vmatpush1.msra.mxu0 0.0
  %133 = vmatprep.subr.mxu0 0.0
  %134 = vmatpush1.msra.mxu0 0.0
  %135 = vmatprep.mubr.f32.mxu0 %v65
  %136 = vmatmul.mubr.f32.gmra.mrb[0].mxu0 %v60
  %v137 = vpop.f32.mrb[0].mxu0
  %v138 = vadd.f32 0.0, %v137
  %v139 = vpop.f32.mrb[0].mxu0
  %140 = vdwg.mxu0
  %vm141 = vcmask 261120
  %v142 = vsel %vm141, %v138, 0.0
  %143 = vadd.xlane.f32.xlu0 %v142
  %v144 = vpop.xlane.xlu0 %143
  %v145 = vrcp.pop 32.0
  %v146 = vmul.f32 %v144, %v145
  %v147 = vsub.f32 %v138, %v146
  %v148 = vmul.f32 %v147, %v147
  %v149 = vsel %vm141, %v148, 0.0
  %150 = vadd.xlane.f32.xlu0 %v149
  %v151 = vpop.xlane.xlu0 %150
  %v152 = vmul.f32 %v151, %v145
  %v153 = vadd.f32 %v152, 1e-05
  %v154 = vrsqrt.pop %v153
  %v155 = vmul.f32 %v147, %v154
  %v156 = vlaneseq
  %v157 = vshrl.u32 %v156, 7
  %v158 = vsub.s32 0, %v157
  %v159 = vrot.slane %v54, %v158
  %v160 = vmul.f32 %v155, %v159
  %v161 = vlaneseq
  %v162 = vshrl.u32 %v161, 7
  %v163 = vsub.s32 0, %v162
  %v164 = vrot.slane %v55, %v163
  %v165 = vadd.f32 %v160, %v164
  %v167 = vsel %vm141, %v165, 0
  %169 = vmatprep.subr.mxu0 0.0
  %170 = vmatpush1.msra.mxu0 %v40
  %171 = vmatprep.subr.mxu0 0.0
  %172 = vmatpush1.msra.mxu0 %v41
  %173 = vmatprep.subr.mxu0 0.0
  %174 = vmatpush1.msra.mxu0 %v42
  %175 = vmatprep.subr.mxu0 0.0
  %176 = vmatpush1.msra.mxu0 %v43
  %177 = vmatprep.subr.mxu0 0.0
  %178 = vmatpush1.msra.mxu0 0.0
  %179 = vmatprep.subr.mxu0 0.0
  %180 = vmatpush1.msra.mxu0 0.0
  %181 = vmatprep.subr.mxu0 0.0
  %182 = vmatpush1.msra.mxu0 0.0
  %183 = vmatprep.subr.mxu0 0.0
  %184 = vmatpush1.msra.mxu0 0.0
  %185 = vmatprep.subr.mxu0 0.0
  %186 = vmatpush1.msra.mxu0 0.0
  %187 = vmatprep.subr.mxu0 0.0
  %188 = vmatpush1.msra.mxu0 0.0
  %189 = vmatprep.subr.mxu0 0.0
  %190 = vmatpush1.msra.mxu0 0.0
  %191 = vmatprep.subr.mxu0 0.0
  %192 = vmatpush1.msra.mxu0 0.0
  %193 = vmatprep.subr.mxu0 0.0
  %194 = vmatpush1.msra.mxu0 0.0
  %195 = vmatprep.subr.mxu0 0.0
  %196 = vmatpush1.msra.mxu0 0.0
  %197 = vmatprep.subr.mxu0 0.0
  %198 = vmatpush1.msra.mxu0 0.0
  %199 = vmatprep.subr.mxu0 0.0
  %200 = vmatpush1.msra.mxu0 0.0
  %201 = vmatprep.subr.mxu0 0.0
  %202 = vmatpush1.msra.mxu0 0.0
  %203 = vmatprep.subr.mxu0 0.0
  %204 = vmatpush1.msra.mxu0 0.0
  %205 = vmatprep.subr.mxu0 0.0
  %206 = vmatpush1.msra.mxu0 0.0
  %207 = vmatprep.subr.mxu0 0.0
  %208 = vmatpush1.msra.mxu0 0.0
  %209 = vmatprep.subr.mxu0 0.0
  %210 = vmatpush1.msra.mxu0 0.0
  %211 = vmatprep.subr.mxu0 0.0
  %212 = vmatpush1.msra.mxu0 0.0
  %213 = vmatprep.subr.mxu0 0.0
  %214 = vmatpush1.msra.mxu0 0.0
  %215 = vmatprep.subr.mxu0 0.0
  %216 = vmatpush1.msra.mxu0 0.0
  %217 = vmatprep.subr.mxu0 0.0
  %218 = vmatpush1.msra.mxu0 0.0
  %219 = vmatprep.subr.mxu0 0.0
  %220 = vmatpush1.msra.mxu0 0.0
  %221 = vmatprep.subr.mxu0 0.0
  %222 = vmatpush1.msra.mxu0 0.0
  %223 = vmatprep.subr.mxu0 0.0
  %224 = vmatpush1.msra.mxu0 0.0
  %225 = vmatprep.subr.mxu0 0.0
  %226 = vmatpush1.msra.mxu0 0.0
  %227 = vmatprep.subr.mxu0 0.0
  %228 = vmatpush1.msra.mxu0 0.0
  %229 = vmatprep.subr.mxu0 0.0
  %230 = vmatpush1.msra.mxu0 0.0
  %231 = vmatprep.subr.mxu0 0.0
  %232 = vmatpush1.msra.mxu0 0.0
  %233 = vmatprep.mubr.f32.mxu0 0.0
  %234 = vmatmul.mubr.f32.gmra.mrb[0].mxu0 %v167
  %v235 = vpop.f32.mrb[0].mxu0
  %v236 = vadd.f32 0.0, %v235
  %v237 = vpop.f32.mrb[0].mxu0
  %238 = vdwg.mxu0
  %v240 = vsel %vm141, %v44, 0
  %v243 = vsel %vm141, %v45, 0
  %v246 = vsel %vm141, %v46, 0
  %v249 = vsel %vm141, %v47, 0
  %251 = vmatprep.subr.mxu0 0.0
  %252 = vmatpush1.xpose.msra.mxu0 %v167
  %253 = vmatprep.subr.mxu0 0.0
  %254 = vmatpush1.xpose.msra.mxu0 0.0
  %255 = vmatprep.subr.mxu0 0.0
  %256 = vmatpush1.xpose.msra.mxu0 0.0
  %257 = vmatprep.subr.mxu0 0.0
  %258 = vmatpush1.xpose.msra.mxu0 0.0
  %259 = vmatprep.subr.mxu0 0.0
  %260 = vmatpush1.xpose.msra.mxu0 0.0
  %261 = vmatprep.subr.mxu0 0.0
  %262 = vmatpush1.xpose.msra.mxu0 0.0
  %263 = vmatprep.subr.mxu0 0.0
  %264 = vmatpush1.xpose.msra.mxu0 0.0
  %265 = vmatprep.subr.mxu0 0.0
  %266 = vmatpush1.xpose.msra.mxu0 0.0
  %267 = vmatprep.subr.mxu0 0.0
  %268 = vmatpush1.xpose.msra.mxu0 0.0
  %269 = vmatprep.subr.mxu0 0.0
  %270 = vmatpush1.xpose.msra.mxu0 0.0
  %271 = vmatprep.subr.mxu0 0.0
  %272 = vmatpush1.xpose.msra.mxu0 0.0
  %273 = vmatprep.subr.mxu0 0.0
  %274 = vmatpush1.xpose.msra.mxu0 0.0
  %275 = vmatprep.subr.mxu0 0.0
  %276 = vmatpush1.xpose.msra.mxu0 0.0
  %277 = vmatprep.subr.mxu0 0.0
  %278 = vmatpush1.xpose.msra.mxu0 0.0
  %279 = vmatprep.subr.mxu0 0.0
  %280 = vmatpush1.xpose.msra.mxu0 0.0
  %281 = vmatprep.subr.mxu0 0.0
  %282 = vmatpush1.xpose.msra.mxu0 0.0
  %283 = vmatprep.subr.mxu0 0.0
  %284 = vmatpush1.xpose.msra.mxu0 0.0
  %285 = vmatprep.subr.mxu0 0.0
  %286 = vmatpush1.xpose.msra.mxu0 0.0
  %287 = vmatprep.subr.mxu0 0.0
  %288 = vmatpush1.xpose.msra.mxu0 0.0
  %289 = vmatprep.subr.mxu0 0.0
  %290 = vmatpush1.xpose.msra.mxu0 0.0
  %291 = vmatprep.subr.mxu0 0.0
  %292 = vmatpush1.xpose.msra.mxu0 0.0
  %293 = vmatprep.subr.mxu0 0.0
  %294 = vmatpush1.xpose.msra.mxu0 0.0
  %295 = vmatprep.subr.mxu0 0.0
  %296 = vmatpush1.xpose.msra.mxu0 0.0
  %297 = vmatprep.subr.mxu0 0.0
  %298 = vmatpush1.xpose.msra.mxu0 0.0
  %299 = vmatprep.subr.mxu0 0.0
  %300 = vmatpush1.xpose.msra.mxu0 0.0
  %301 = vmatprep.subr.mxu0 0.0
  %302 = vmatpush1.xpose.msra.mxu0 0.0
  %303 = vmatprep.subr.mxu0 0.0
  %304 = vmatpush1.xpose.msra.mxu0 0.0
  %305 = vmatprep.subr.mxu0 0.0
  %306 = vmatpush1.xpose.msra.mxu0 0.0
  %307 = vmatprep.subr.mxu0 0.0
  %308 = vmatpush1.xpose.msra.mxu0 0.0
  %309 = vmatprep.subr.mxu0 0.0
  %310 = vmatpush1.xpose.msra.mxu0 0.0
  %311 = vmatprep.subr.mxu0 0.0
  %312 = vmatpush1.xpose.msra.mxu0 0.0
  %313 = vmatprep.subr.mxu0 0.0
  %314 = vmatpush1.xpose.msra.mxu0 0.0
  %315 = vmatprep.mubr.f32.mxu0 0.0
  %316 = vmatmul.mubr.f32.gmra.mrb[0].mxu0 %v240
  %v317 = vpop.f32.mrb[0].mxu0
  %v318 = vadd.f32 0.0, %v317
  %v319 = vpop.f32.mrb[0].mxu0
  %320 = vmatprep.mubr.f32.mxu0 0.0
  %321 = vmatmul.mubr.f32.gmra.mrb[0].mxu0 %v243
  %v322 = vpop.f32.mrb[0].mxu0
  %v323 = vadd.f32 0.0, %v322
  %v324 = vpop.f32.mrb[0].mxu0
  %325 = vmatprep.mubr.f32.mxu0 0.0
  %326 = vmatmul.mubr.f32.gmra.mrb[0].mxu0 %v246
  %v327 = vpop.f32.mrb[0].mxu0
  %v328 = vadd.f32 0.0, %v327
  %v329 = vpop.f32.mrb[0].mxu0
  %330 = vmatprep.mubr.f32.mxu0 0.0
  %331 = vmatmul.mubr.f32.gmra.mrb[0].mxu0 %v249
  %v332 = vpop.f32.mrb[0].mxu0
  %v333 = vadd.f32 0.0, %v332
  %v334 = vpop.f32.mrb[0].mxu0
  %335 = vdwg.mxu0
  %vm336 = vcmask 269312
  %v338 = vsel %vm336, %v36, 0
  %v341 = vsel %vm336, %v37, 0
  %v344 = vsel %vm336, %v38, 0
  %v347 = vsel %vm336, %v39, 0
  %v350 = vsel %vm336, %v62, 0
  %352 = vmatprep.subr.mxu0 0.0
  %353 = vmatpush1.xpose.msra.mxu0 %v350
  %354 = vmatprep.subr.mxu0 0.0
  %355 = vmatpush1.xpose.msra.mxu0 0.0
  %356 = vmatprep.subr.mxu0 0.0
  %357 = vmatpush1.xpose.msra.mxu0 0.0
  %358 = vmatprep.subr.mxu0 0.0
  %359 = vmatpush1.xpose.msra.mxu0 0.0
  %360 = vmatprep.subr.mxu0 0.0
  %361 = vmatpush1.xpose.msra.mxu0 0.0
  %362 = vmatprep.subr.mxu0 0.0
  %363 = vmatpush1.xpose.msra.mxu0 0.0
  %364 = vmatprep.subr.mxu0 0.0
  %365 = vmatpush1.xpose.msra.mxu0 0.0
  %366 = vmatprep.subr.mxu0 0.0
  %367 = vmatpush1.xpose.msra.mxu0 0.0
  %368 = vmatprep.subr.mxu0 0.0
  %369 = vmatpush1.xpose.msra.mxu0 0.0
  %370 = vmatprep.subr.mxu0 0.0
  %371 = vmatpush1.xpose.msra.mxu0 0.0
  %372 = vmatprep.subr.mxu0 0.0
  %373 = vmatpush1.xpose.msra.mxu0 0.0
  %374 = vmatprep.subr.mxu0 0.0
  %375 = vmatpush1.xpose.msra.mxu0 0.0
  %376 = vmatprep.subr.mxu0 0.0
  %377 = vmatpush1.xpose.msra.mxu0 0.0
  %378 = vmatprep.subr.mxu0 0.0
  %379 = vmatpush1.xpose.msra.mxu0 0.0
  %380 = vmatprep.subr.mxu0 0.0
  %381 = vmatpush1.xpose.msra.mxu0 0.0
  %382 = vmatprep.subr.mxu0 0.0
  %383 = vmatpush1.xpose.msra.mxu0 0.0
  %384 = vmatprep.subr.mxu0 0.0
  %385 = vmatpush1.xpose.msra.mxu0 0.0
  %386 = vmatprep.subr.mxu0 0.0
  %387 = vmatpush1.xpose.msra.mxu0 0.0
  %388 = vmatprep.subr.mxu0 0.0
  %389 = vmatpush1.xpose.msra.mxu0 0.0
  %390 = vmatprep.subr.mxu0 0.0
  %391 = vmatpush1.xpose.msra.mxu0 0.0
  %392 = vmatprep.subr.mxu0 0.0
  %393 = vmatpush1.xpose.msra.mxu0 0.0
  %394 = vmatprep.subr.mxu0 0.0
  %395 = vmatpush1.xpose.msra.mxu0 0.0
  %396 = vmatprep.subr.mxu0 0.0
  %397 = vmatpush1.xpose.msra.mxu0 0.0
  %398 = vmatprep.subr.mxu0 0.0
  %399 = vmatpush1.xpose.msra.mxu0 0.0
  %400 = vmatprep.subr.mxu0 0.0
  %401 = vmatpush1.xpose.msra.mxu0 0.0
  %402 = vmatprep.subr.mxu0 0.0
  %403 = vmatpush1.xpose.msra.mxu0 0.0
  %404 = vmatprep.subr.mxu0 0.0
  %405 = vmatpush1.xpose.msra.mxu0 0.0
  %406 = vmatprep.subr.mxu0 0.0
  %407 = vmatpush1.xpose.msra.mxu0 0.0
  %408 = vmatprep.subr.mxu0 0.0
  %409 = vmatpush1.xpose.msra.mxu0 0.0
  %410 = vmatprep.subr.mxu0 0.0
  %411 = vmatpush1.xpose.msra.mxu0 0.0
  %412 = vmatprep.subr.mxu0 0.0
  %413 = vmatpush1.xpose.msra.mxu0 0.0
  %414 = vmatprep.subr.mxu0 0.0
  %415 = vmatpush1.xpose.msra.mxu0 0.0
  %416 = vmatprep.mubr.f32.mxu0 0.0
  %417 = vmatmul.mubr.f32.gmra.mrb[0].mxu0 %v338
  %v418 = vpop.f32.mrb[0].mxu0
  %v419 = vadd.f32 0.0, %v418
  %v420 = vpop.f32.mrb[0].mxu0
  %421 = vmatprep.mubr.f32.mxu0 0.0
  %422 = vmatmul.mubr.f32.gmra.mrb[0].mxu0 %v341
  %v423 = vpop.f32.mrb[0].mxu0
  %v424 = vadd.f32 0.0, %v423
  %v425 = vpop.f32.mrb[0].mxu0
  %426 = vmatprep.mubr.f32.mxu0 0.0
  %427 = vmatmul.mubr.f32.gmra.mrb[0].mxu0 %v344
  %v428 = vpop.f32.mrb[0].mxu0
  %v429 = vadd.f32 0.0, %v428
  %v430 = vpop.f32.mrb[0].mxu0
  %431 = vmatprep.mubr.f32.mxu0 0.0
  %432 = vmatmul.mubr.f32.gmra.mrb[0].mxu0 %v347
  %v433 = vpop.f32.mrb[0].mxu0
  %v434 = vadd.f32 0.0, %v433
  %v435 = vpop.f32.mrb[0].mxu0
  %436 = vdwg.mxu0
  %v437 = vsub.f32 0.0, %v419
  %v438 = vsub.f32 0.0, %v424
  %v439 = vsub.f32 0.0, %v429
  %v440 = vsub.f32 0.0, %v434
  %v441 = vmul.f32 %v437, 1.442695
  %v442 = vpow.pop %v441
  %v443 = vmul.f32 %v438, 1.442695
  %v444 = vpow.pop %v443
  %v445 = vmul.f32 %v439, 1.442695
  %v446 = vpow.pop %v445
  %v447 = vmul.f32 %v440, 1.442695
  %v448 = vpow.pop %v447
  %v449 = vadd.f32 %v442, 1.0
  %v450 = vadd.f32 %v444, 1.0
  %v451 = vadd.f32 %v446, 1.0
  %v452 = vadd.f32 %v448, 1.0
  %v453 = vrcp.pop %v449
  %v454 = vmul.f32 1.0, %v453
  %v455 = vrcp.pop %v450
  %v456 = vmul.f32 1.0, %v455
  %v457 = vrcp.pop %v451
  %v458 = vmul.f32 1.0, %v457
  %v459 = vrcp.pop %v452
  %v460 = vmul.f32 1.0, %v459
  %v461 = vmul.f32 %v419, %v454
  %v462 = vmul.f32 %v424, %v456
  %v463 = vmul.f32 %v429, %v458
  %v464 = vmul.f32 %v434, %v460
  %466 = vset.pattern.permute.xlu0 0
  %467 = vperm.xlu0 %466, %v461
  %v468 = vpop.permute.xlu0 %467
  %471 = vset.pattern.permute.xlu0 0
  %472 = vperm.xlu0 %471, %v462
  %v473 = vpop.permute.xlu0 %472
  %476 = vset.pattern.permute.xlu0 0
  %477 = vperm.xlu0 %476, %v463
  %v478 = vpop.permute.xlu0 %477
  %481 = vset.pattern.permute.xlu0 0
  %482 = vperm.xlu0 %481, %v464
  %v483 = vpop.permute.xlu0 %482
  %485 = vset.pattern.permute.xlu0 1
  %486 = vperm.xlu0 %485, %v461
  %v487 = vpop.permute.xlu0 %486
  %489 = vset.pattern.permute.xlu0 1
  %490 = vperm.xlu0 %489, %v462
  %v491 = vpop.permute.xlu0 %490
  %493 = vset.pattern.permute.xlu0 1
  %494 = vperm.xlu0 %493, %v463
  %v495 = vpop.permute.xlu0 %494
  %497 = vset.pattern.permute.xlu0 1
  %498 = vperm.xlu0 %497, %v464
  %v499 = vpop.permute.xlu0 %498
  %vm501 = vcmask 39936
  %v503 = vsel %vm501, %v48, 0
  %v506 = vsel %vm501, %v49, 0
  %v509 = vsel %vm501, %v50, 0
  %v512 = vsel %vm501, %v51, 0
  %vm514 = vcmask 1044480
  %v516 = vsel %vm514, %v56, 0
  %v519 = vsel %vm514, %v57, 0
  %v522 = vsel %vm514, %v58, 0
  %v525 = vsel %vm514, %v59, 0
  %527 = vmatprep.subr.mxu0 %v519
  %528 = vmatpush1.msra.mxu0 %v516
  %529 = vmatprep.subr.mxu0 0.0
  %530 = vmatpush1.msra.mxu0 0.0
  %531 = vmatprep.subr.mxu0 0.0
  %532 = vmatpush1.msra.mxu0 0.0
  %533 = vmatprep.subr.mxu0 0.0
  %534 = vmatpush1.msra.mxu0 0.0
  %535 = vmatprep.subr.mxu0 0.0
  %536 = vmatpush1.msra.mxu0 0.0
  %537 = vmatprep.subr.mxu0 0.0
  %538 = vmatpush1.msra.mxu0 0.0
  %539 = vmatprep.subr.mxu0 0.0
  %540 = vmatpush1.msra.mxu0 0.0
  %541 = vmatprep.subr.mxu0 0.0
  %542 = vmatpush1.msra.mxu0 0.0
  %543 = vmatprep.subr.mxu0 0.0
  %544 = vmatpush1.msra.mxu0 0.0
  %545 = vmatprep.subr.mxu0 0.0
  %546 = vmatpush1.msra.mxu0 0.0
  %547 = vmatprep.subr.mxu0 0.0
  %548 = vmatpush1.msra.mxu0 0.0
  %549 = vmatprep.subr.mxu0 0.0
  %550 = vmatpush1.msra.mxu0 0.0
  %551 = vmatprep.subr.mxu0 0.0
  %552 = vmatpush1.msra.mxu0 0.0
  %553 = vmatprep.subr.mxu0 0.0
  %554 = vmatpush1.msra.mxu0 0.0
  %555 = vmatprep.subr.mxu0 0.0
  %556 = vmatpush1.msra.mxu0 0.0
  %557 = vmatprep.subr.mxu0 0.0
  %558 = vmatpush1.msra.mxu0 0.0
  %559 = vmatprep.subr.mxu0 0.0
  %560 = vmatpush1.msra.mxu0 0.0
  %561 = vmatprep.subr.mxu0 0.0
  %562 = vmatpush1.msra.mxu0 0.0
  %563 = vmatprep.subr.mxu0 0.0
  %564 = vmatpush1.msra.mxu0 0.0
  %565 = vmatprep.subr.mxu0 0.0
  %566 = vmatpush1.msra.mxu0 0.0
  %567 = vmatprep.subr.mxu0 0.0
  %568 = vmatpush1.msra.mxu0 0.0
  %569 = vmatprep.subr.mxu0 0.0
  %570 = vmatpush1.msra.mxu0 0.0
  %571 = vmatprep.subr.mxu0 0.0
  %572 = vmatpush1.msra.mxu0 0.0
  %573 = vmatprep.subr.mxu0 0.0
  %574 = vmatpush1.msra.mxu0 0.0
  %575 = vmatprep.subr.mxu0 0.0
  %576 = vmatpush1.msra.mxu0 0.0
  %577 = vmatprep.subr.mxu0 0.0
  %578 = vmatpush1.msra.mxu0 0.0
  %579 = vmatprep.subr.mxu0 0.0
  %580 = vmatpush1.msra.mxu0 0.0
  %581 = vmatprep.subr.mxu0 0.0
  %582 = vmatpush1.msra.mxu0 0.0
  %583 = vmatprep.subr.mxu0 0.0
  %584 = vmatpush1.msra.mxu0 0.0
  %585 = vmatprep.subr.mxu0 0.0
  %586 = vmatpush1.msra.mxu0 0.0
  %587 = vmatprep.subr.mxu0 0.0
  %588 = vmatpush1.msra.mxu0 0.0
  %589 = vmatprep.subr.mxu0 0.0
  %590 = vmatpush1.msra.mxu0 0.0
  %591 = vmatprep.mubr.f32.mxu0 0.0
  %592 = vmatmul.mubr.f32.gmra.mrb[0].mxu0 %v503
  %v593 = vpop.f32.mrb[0].mxu0
  %v594 = vadd.f32 %v468, %v593
  %v595 = vpop.f32.mrb[0].mxu0
  %v596 = vadd.f32 %v468, %v595
  %597 = vmatprep.mubr.f32.mxu0 0.0
  %598 = vmatmul.mubr.f32.gmra.mrb[0].mxu0 %v506
  %v599 = vpop.f32.mrb[0].mxu0
  %v600 = vadd.f32 %v473, %v599
  %v601 = vpop.f32.mrb[0].mxu0
  %v602 = vadd.f32 %v473, %v601
  %603 = vmatprep.mubr.f32.mxu0 0.0
  %604 = vmatmul.mubr.f32.gmra.mrb[0].mxu0 %v509
  %v605 = vpop.f32.mrb[0].mxu0
  %v606 = vadd.f32 %v478, %v605
  %v607 = vpop.f32.mrb[0].mxu0
  %v608 = vadd.f32 %v478, %v607
  %609 = vmatprep.mubr.f32.mxu0 0.0
  %610 = vmatmul.mubr.f32.gmra.mrb[0].mxu0 %v512
  %v611 = vpop.f32.mrb[0].mxu0
  %v612 = vadd.f32 %v483, %v611
  %v613 = vpop.f32.mrb[0].mxu0
  %v614 = vadd.f32 %v483, %v613
  %615 = vdwg.mxu0
  %616 = vmatprep.subr.mxu0 %v525
  %617 = vmatpush1.msra.mxu0 %v522
  %618 = vmatprep.subr.mxu0 0.0
  %619 = vmatpush1.msra.mxu0 0.0
  %620 = vmatprep.subr.mxu0 0.0
  %621 = vmatpush1.msra.mxu0 0.0
  %622 = vmatprep.subr.mxu0 0.0
  %623 = vmatpush1.msra.mxu0 0.0
  %624 = vmatprep.subr.mxu0 0.0
  %625 = vmatpush1.msra.mxu0 0.0
  %626 = vmatprep.subr.mxu0 0.0
  %627 = vmatpush1.msra.mxu0 0.0
  %628 = vmatprep.subr.mxu0 0.0
  %629 = vmatpush1.msra.mxu0 0.0
  %630 = vmatprep.subr.mxu0 0.0
  %631 = vmatpush1.msra.mxu0 0.0
  %632 = vmatprep.subr.mxu0 0.0
  %633 = vmatpush1.msra.mxu0 0.0
  %634 = vmatprep.subr.mxu0 0.0
  %635 = vmatpush1.msra.mxu0 0.0
  %636 = vmatprep.subr.mxu0 0.0
  %637 = vmatpush1.msra.mxu0 0.0
  %638 = vmatprep.subr.mxu0 0.0
  %639 = vmatpush1.msra.mxu0 0.0
  %640 = vmatprep.subr.mxu0 0.0
  %641 = vmatpush1.msra.mxu0 0.0
  %642 = vmatprep.subr.mxu0 0.0
  %643 = vmatpush1.msra.mxu0 0.0
  %644 = vmatprep.subr.mxu0 0.0
  %645 = vmatpush1.msra.mxu0 0.0
  %646 = vmatprep.subr.mxu0 0.0
  %647 = vmatpush1.msra.mxu0 0.0
  %648 = vmatprep.subr.mxu0 0.0
  %649 = vmatpush1.msra.mxu0 0.0
  %650 = vmatprep.subr.mxu0 0.0
  %651 = vmatpush1.msra.mxu0 0.0
  %652 = vmatprep.subr.mxu0 0.0
  %653 = vmatpush1.msra.mxu0 0.0
  %654 = vmatprep.subr.mxu0 0.0
  %655 = vmatpush1.msra.mxu0 0.0
  %656 = vmatprep.subr.mxu0 0.0
  %657 = vmatpush1.msra.mxu0 0.0
  %658 = vmatprep.subr.mxu0 0.0
  %659 = vmatpush1.msra.mxu0 0.0
  %660 = vmatprep.subr.mxu0 0.0
  %661 = vmatpush1.msra.mxu0 0.0
  %662 = vmatprep.subr.mxu0 0.0
  %663 = vmatpush1.msra.mxu0 0.0
  %664 = vmatprep.subr.mxu0 0.0
  %665 = vmatpush1.msra.mxu0 0.0
  %666 = vmatprep.subr.mxu0 0.0
  %667 = vmatpush1.msra.mxu0 0.0
  %668 = vmatprep.subr.mxu0 0.0
  %669 = vmatpush1.msra.mxu0 0.0
  %670 = vmatprep.subr.mxu0 0.0
  %671 = vmatpush1.msra.mxu0 0.0
  %672 = vmatprep.subr.mxu0 0.0
  %673 = vmatpush1.msra.mxu0 0.0
  %674 = vmatprep.subr.mxu0 0.0
  %675 = vmatpush1.msra.mxu0 0.0
  %676 = vmatprep.subr.mxu0 0.0
  %677 = vmatpush1.msra.mxu0 0.0
  %678 = vmatprep.subr.mxu0 0.0
  %679 = vmatpush1.msra.mxu0 0.0
  %680 = vmatprep.mubr.f32.mxu0 0.0
  %681 = vmatmul.mubr.f32.gmra.mrb[0].mxu0 %v503
  %v682 = vpop.f32.mrb[0].mxu0
  %v683 = vadd.f32 %v487, %v682
  %v684 = vpop.f32.mrb[0].mxu0
  %v685 = vadd.f32 %v487, %v684
  %686 = vmatprep.mubr.f32.mxu0 0.0
  %687 = vmatmul.mubr.f32.gmra.mrb[0].mxu0 %v506
  %v688 = vpop.f32.mrb[0].mxu0
  %v689 = vadd.f32 %v491, %v688
  %v690 = vpop.f32.mrb[0].mxu0
  %v691 = vadd.f32 %v491, %v690
  %692 = vmatprep.mubr.f32.mxu0 0.0
  %693 = vmatmul.mubr.f32.gmra.mrb[0].mxu0 %v509
  %v694 = vpop.f32.mrb[0].mxu0
  %v695 = vadd.f32 %v495, %v694
  %v696 = vpop.f32.mrb[0].mxu0
  %v697 = vadd.f32 %v495, %v696
  %698 = vmatprep.mubr.f32.mxu0 0.0
  %699 = vmatmul.mubr.f32.gmra.mrb[0].mxu0 %v512
  %v700 = vpop.f32.mrb[0].mxu0
  %v701 = vadd.f32 %v499, %v700
  %v702 = vpop.f32.mrb[0].mxu0
  %v703 = vadd.f32 %v499, %v702
  %704 = vdwg.mxu0
  %v706 = vsel %vm141, %v28, 0
  %v709 = vsel %vm141, %v29, 0
  %v712 = vsel %vm141, %v30, 0
  %v715 = vsel %vm141, %v31, 0
  %717 = vmatprep.subr.mxu0 %v596
  %718 = vmatpush1.msra.mxu0 %v594
  %719 = vmatprep.subr.mxu0 %v602
  %720 = vmatpush1.msra.mxu0 %v600
  %721 = vmatprep.subr.mxu0 %v608
  %722 = vmatpush1.msra.mxu0 %v606
  %723 = vmatprep.subr.mxu0 %v614
  %724 = vmatpush1.msra.mxu0 %v612
  %725 = vmatprep.subr.mxu0 0.0
  %726 = vmatpush1.msra.mxu0 0.0
  %727 = vmatprep.subr.mxu0 0.0
  %728 = vmatpush1.msra.mxu0 0.0
  %729 = vmatprep.subr.mxu0 0.0
  %730 = vmatpush1.msra.mxu0 0.0
  %731 = vmatprep.subr.mxu0 0.0
  %732 = vmatpush1.msra.mxu0 0.0
  %733 = vmatprep.subr.mxu0 0.0
  %734 = vmatpush1.msra.mxu0 0.0
  %735 = vmatprep.subr.mxu0 0.0
  %736 = vmatpush1.msra.mxu0 0.0
  %737 = vmatprep.subr.mxu0 0.0
  %738 = vmatpush1.msra.mxu0 0.0
  %739 = vmatprep.subr.mxu0 0.0
  %740 = vmatpush1.msra.mxu0 0.0
  %741 = vmatprep.subr.mxu0 0.0
  %742 = vmatpush1.msra.mxu0 0.0
  %743 = vmatprep.subr.mxu0 0.0
  %744 = vmatpush1.msra.mxu0 0.0
  %745 = vmatprep.subr.mxu0 0.0
  %746 = vmatpush1.msra.mxu0 0.0
  %747 = vmatprep.subr.mxu0 0.0
  %748 = vmatpush1.msra.mxu0 0.0
  %749 = vmatprep.subr.mxu0 0.0
  %750 = vmatpush1.msra.mxu0 0.0
  %751 = vmatprep.subr.mxu0 0.0
  %752 = vmatpush1.msra.mxu0 0.0
  %753 = vmatprep.subr.mxu0 0.0
  %754 = vmatpush1.msra.mxu0 0.0
  %755 = vmatprep.subr.mxu0 0.0
  %756 = vmatpush1.msra.mxu0 0.0
  %757 = vmatprep.subr.mxu0 0.0
  %758 = vmatpush1.msra.mxu0 0.0
  %759 = vmatprep.subr.mxu0 0.0
  %760 = vmatpush1.msra.mxu0 0.0
  %761 = vmatprep.subr.mxu0 0.0
  %762 = vmatpush1.msra.mxu0 0.0
  %763 = vmatprep.subr.mxu0 0.0
  %764 = vmatpush1.msra.mxu0 0.0
  %765 = vmatprep.subr.mxu0 0.0
  %766 = vmatpush1.msra.mxu0 0.0
  %767 = vmatprep.subr.mxu0 0.0
  %768 = vmatpush1.msra.mxu0 0.0
  %769 = vmatprep.subr.mxu0 0.0
  %770 = vmatpush1.msra.mxu0 0.0
  %771 = vmatprep.subr.mxu0 0.0
  %772 = vmatpush1.msra.mxu0 0.0
  %773 = vmatprep.subr.mxu0 0.0
  %774 = vmatpush1.msra.mxu0 0.0
  %775 = vmatprep.subr.mxu0 0.0
  %776 = vmatpush1.msra.mxu0 0.0
  %777 = vmatprep.subr.mxu0 0.0
  %778 = vmatpush1.msra.mxu0 0.0
  %779 = vmatprep.subr.mxu0 0.0
  %780 = vmatpush1.msra.mxu0 0.0
  %781 = vmatprep.mubr.f32.mxu0 0.0
  %782 = vmatmul.mubr.f32.gmra.mrb[0].mxu0 %v706
  %v783 = vpop.f32.mrb[0].mxu0
  %v784 = vadd.f32 0.0, %v783
  %v785 = vpop.f32.mrb[0].mxu0
  %v786 = vadd.f32 0.0, %v785
  %787 = vmatprep.mubr.f32.mxu0 0.0
  %788 = vmatmul.mubr.f32.gmra.mrb[0].mxu0 %v709
  %v789 = vpop.f32.mrb[0].mxu0
  %v790 = vadd.f32 0.0, %v789
  %v791 = vpop.f32.mrb[0].mxu0
  %v792 = vadd.f32 0.0, %v791
  %793 = vmatprep.mubr.f32.mxu0 0.0
  %794 = vmatmul.mubr.f32.gmra.mrb[0].mxu0 %v712
  %v795 = vpop.f32.mrb[0].mxu0
  %v796 = vadd.f32 0.0, %v795
  %v797 = vpop.f32.mrb[0].mxu0
  %v798 = vadd.f32 0.0, %v797
  %799 = vmatprep.mubr.f32.mxu0 0.0
  %800 = vmatmul.mubr.f32.gmra.mrb[0].mxu0 %v715
  %v801 = vpop.f32.mrb[0].mxu0
  %v802 = vadd.f32 0.0, %v801
  %v803 = vpop.f32.mrb[0].mxu0
  %v804 = vadd.f32 0.0, %v803
  %805 = vdwg.mxu0
  %806 = vmatprep.subr.mxu0 %v685
  %807 = vmatpush1.msra.mxu0 %v683
  %808 = vmatprep.subr.mxu0 %v691
  %809 = vmatpush1.msra.mxu0 %v689
  %810 = vmatprep.subr.mxu0 %v697
  %811 = vmatpush1.msra.mxu0 %v695
  %812 = vmatprep.subr.mxu0 %v703
  %813 = vmatpush1.msra.mxu0 %v701
  %814 = vmatprep.subr.mxu0 0.0
  %815 = vmatpush1.msra.mxu0 0.0
  %816 = vmatprep.subr.mxu0 0.0
  %817 = vmatpush1.msra.mxu0 0.0
  %818 = vmatprep.subr.mxu0 0.0
  %819 = vmatpush1.msra.mxu0 0.0
  %820 = vmatprep.subr.mxu0 0.0
  %821 = vmatpush1.msra.mxu0 0.0
  %822 = vmatprep.subr.mxu0 0.0
  %823 = vmatpush1.msra.mxu0 0.0
  %824 = vmatprep.subr.mxu0 0.0
  %825 = vmatpush1.msra.mxu0 0.0
  %826 = vmatprep.subr.mxu0 0.0
  %827 = vmatpush1.msra.mxu0 0.0
  %828 = vmatprep.subr.mxu0 0.0
  %829 = vmatpush1.msra.mxu0 0.0
  %830 = vmatprep.subr.mxu0 0.0
  %831 = vmatpush1.msra.mxu0 0.0
  %832 = vmatprep.subr.mxu0 0.0
  %833 = vmatpush1.msra.mxu0 0.0
  %834 = vmatprep.subr.mxu0 0.0
  %835 = vmatpush1.msra.mxu0 0.0
  %836 = vmatprep.subr.mxu0 0.0
  %837 = vmatpush1.msra.mxu0 0.0
  %838 = vmatprep.subr.mxu0 0.0
  %839 = vmatpush1.msra.mxu0 0.0
  %840 = vmatprep.subr.mxu0 0.0
  %841 = vmatpush1.msra.mxu0 0.0
  %842 = vmatprep.subr.mxu0 0.0
  %843 = vmatpush1.msra.mxu0 0.0
  %844 = vmatprep.subr.mxu0 0.0
  %845 = vmatpush1.msra.mxu0 0.0
  %846 = vmatprep.subr.mxu0 0.0
  %847 = vmatpush1.msra.mxu0 0.0
  %848 = vmatprep.subr.mxu0 0.0
  %849 = vmatpush1.msra.mxu0 0.0
  %850 = vmatprep.subr.mxu0 0.0
  %851 = vmatpush1.msra.mxu0 0.0
  %852 = vmatprep.subr.mxu0 0.0
  %853 = vmatpush1.msra.mxu0 0.0
  %854 = vmatprep.subr.mxu0 0.0
  %855 = vmatpush1.msra.mxu0 0.0
  %856 = vmatprep.subr.mxu0 0.0
  %857 = vmatpush1.msra.mxu0 0.0
  %858 = vmatprep.subr.mxu0 0.0
  %859 = vmatpush1.msra.mxu0 0.0
  %860 = vmatprep.subr.mxu0 0.0
  %861 = vmatpush1.msra.mxu0 0.0
  %862 = vmatprep.subr.mxu0 0.0
  %863 = vmatpush1.msra.mxu0 0.0
  %864 = vmatprep.subr.mxu0 0.0
  %865 = vmatpush1.msra.mxu0 0.0
  %866 = vmatprep.subr.mxu0 0.0
  %867 = vmatpush1.msra.mxu0 0.0
  %868 = vmatprep.subr.mxu0 0.0
  %869 = vmatpush1.msra.mxu0 0.0
  %870 = vmatprep.mubr.f32.mxu0 0.0
  %871 = vmatmul.mubr.f32.gmra.mrb[0].mxu0 %v706
  %v872 = vpop.f32.mrb[0].mxu0
  %v873 = vadd.f32 0.0, %v872
  %v874 = vpop.f32.mrb[0].mxu0
  %v875 = vadd.f32 0.0, %v874
  %876 = vmatprep.mubr.f32.mxu0 0.0
  %877 = vmatmul.mubr.f32.gmra.mrb[0].mxu0 %v709
  %v878 = vpop.f32.mrb[0].mxu0
  %v879 = vadd.f32 0.0, %v878
  %v880 = vpop.f32.mrb[0].mxu0
  %v881 = vadd.f32 0.0, %v880
  %882 = vmatprep.mubr.f32.mxu0 0.0
  %883 = vmatmul.mubr.f32.gmra.mrb[0].mxu0 %v712
  %v884 = vpop.f32.mrb[0].mxu0
  %v885 = vadd.f32 0.0, %v884
  %v886 = vpop.f32.mrb[0].mxu0
  %v887 = vadd.f32 0.0, %v886
  %888 = vmatprep.mubr.f32.mxu0 0.0
  %889 = vmatmul.mubr.f32.gmra.mrb[0].mxu0 %v715
  %v890 = vpop.f32.mrb[0].mxu0
  %v891 = vadd.f32 0.0, %v890
  %v892 = vpop.f32.mrb[0].mxu0
  %v893 = vadd.f32 0.0, %v892
  %894 = vdwg.mxu0
  %v896 = vsel %vm141, %v236, 0
  %898 = vmatprep.subr.mxu0 %v786
  %899 = vmatpush1.msra.mxu0 %v784
  %900 = vmatprep.subr.mxu0 %v792
  %901 = vmatpush1.msra.mxu0 %v790
  %902 = vmatprep.subr.mxu0 %v798
  %903 = vmatpush1.msra.mxu0 %v796
  %904 = vmatprep.subr.mxu0 %v804
  %905 = vmatpush1.msra.mxu0 %v802
  %906 = vmatprep.subr.mxu0 0.0
  %907 = vmatpush1.msra.mxu0 0.0
  %908 = vmatprep.subr.mxu0 0.0
  %909 = vmatpush1.msra.mxu0 0.0
  %910 = vmatprep.subr.mxu0 0.0
  %911 = vmatpush1.msra.mxu0 0.0
  %912 = vmatprep.subr.mxu0 0.0
  %913 = vmatpush1.msra.mxu0 0.0
  %914 = vmatprep.subr.mxu0 0.0
  %915 = vmatpush1.msra.mxu0 0.0
  %916 = vmatprep.subr.mxu0 0.0
  %917 = vmatpush1.msra.mxu0 0.0
  %918 = vmatprep.subr.mxu0 0.0
  %919 = vmatpush1.msra.mxu0 0.0
  %920 = vmatprep.subr.mxu0 0.0
  %921 = vmatpush1.msra.mxu0 0.0
  %922 = vmatprep.subr.mxu0 0.0
  %923 = vmatpush1.msra.mxu0 0.0
  %924 = vmatprep.subr.mxu0 0.0
  %925 = vmatpush1.msra.mxu0 0.0
  %926 = vmatprep.subr.mxu0 0.0
  %927 = vmatpush1.msra.mxu0 0.0
  %928 = vmatprep.subr.mxu0 0.0
  %929 = vmatpush1.msra.mxu0 0.0
  %930 = vmatprep.subr.mxu0 0.0
  %931 = vmatpush1.msra.mxu0 0.0
  %932 = vmatprep.subr.mxu0 0.0
  %933 = vmatpush1.msra.mxu0 0.0
  %934 = vmatprep.subr.mxu0 0.0
  %935 = vmatpush1.msra.mxu0 0.0
  %936 = vmatprep.subr.mxu0 0.0
  %937 = vmatpush1.msra.mxu0 0.0
  %938 = vmatprep.subr.mxu0 0.0
  %939 = vmatpush1.msra.mxu0 0.0
  %940 = vmatprep.subr.mxu0 0.0
  %941 = vmatpush1.msra.mxu0 0.0
  %942 = vmatprep.subr.mxu0 0.0
  %943 = vmatpush1.msra.mxu0 0.0
  %944 = vmatprep.subr.mxu0 0.0
  %945 = vmatpush1.msra.mxu0 0.0
  %946 = vmatprep.subr.mxu0 0.0
  %947 = vmatpush1.msra.mxu0 0.0
  %948 = vmatprep.subr.mxu0 0.0
  %949 = vmatpush1.msra.mxu0 0.0
  %950 = vmatprep.subr.mxu0 0.0
  %951 = vmatpush1.msra.mxu0 0.0
  %952 = vmatprep.subr.mxu0 0.0
  %953 = vmatpush1.msra.mxu0 0.0
  %954 = vmatprep.subr.mxu0 0.0
  %955 = vmatpush1.msra.mxu0 0.0
  %956 = vmatprep.subr.mxu0 0.0
  %957 = vmatpush1.msra.mxu0 0.0
  %958 = vmatprep.subr.mxu0 0.0
  %959 = vmatpush1.msra.mxu0 0.0
  %960 = vmatprep.subr.mxu0 0.0
  %961 = vmatpush1.msra.mxu0 0.0
  %962 = vmatprep.mubr.f32.mxu0 0.0
  %963 = vmatmul.mubr.f32.gmra.mrb[0].mxu0 %v896
  %v964 = vpop.f32.mrb[0].mxu0
  %v965 = vadd.f32 0.0, %v964
  %v966 = vpop.f32.mrb[0].mxu0
  %v967 = vadd.f32 0.0, %v966
  %968 = vdwg.mxu0
  %v969 = vsel %vm67, %v965, -inf
  %v970 = vrot.slane %v969, 4
  %v971 = vmax.f32 %v969, %v970
  %v972 = vrot.slane %v971, 2
  %v973 = vmax.f32 %v971, %v972
  %v974 = vrot.slane %v973, 1
  %v975 = vmax.f32 %v973, %v974
  %v976 = vsel %vm67, %v967, -inf
  %v977 = vrot.slane %v976, 4
  %v978 = vmax.f32 %v976, %v977
  %v979 = vrot.slane %v978, 2
  %v980 = vmax.f32 %v978, %v979
  %v981 = vrot.slane %v980, 1
  %v982 = vmax.f32 %v980, %v981
  %v983 = vsub.f32 %v965, %v975
  %v984 = vsub.f32 %v967, %v982
  %v985 = vmul.f32 %v983, 1.442695
  %v986 = vpow.pop %v985
  %v987 = vmul.f32 %v984, 1.442695
  %v988 = vpow.pop %v987
  %v989 = vsel %vm67, %v986, 0.0
  %v990 = vrot.slane %v989, 4
  %v991 = vadd.f32 %v989, %v990
  %v992 = vrot.slane %v991, 2
  %v993 = vadd.f32 %v991, %v992
  %v994 = vrot.slane %v993, 1
  %v995 = vadd.f32 %v993, %v994
  %v996 = vsel %vm67, %v988, 0.0
  %v997 = vrot.slane %v996, 4
  %v998 = vadd.f32 %v996, %v997
  %v999 = vrot.slane %v998, 2
  %v1000 = vadd.f32 %v998, %v999
  %v1001 = vrot.slane %v1000, 1
  %v1002 = vadd.f32 %v1000, %v1001
  %v1003 = vrcp.pop %v995
  %v1004 = vrcp.pop %v1002
  %v1005 = vmul.f32 %v986, %v1003
  %v1006 = vmul.f32 %v988, %v1004
  %v1008 = vsel %vm63, %v318, 0
  %v1011 = vsel %vm63, %v323, 0
  %v1014 = vsel %vm63, %v328, 0
  %v1017 = vsel %vm63, %v333, 0
  %v1020 = vsel %vm67, %v1005, 0
  %v1023 = vsel %vm67, %v1006, 0
  %1025 = vmatprep.subr.mxu0 %v1023
  %1026 = vmatpush1.msra.mxu0 %v1020
  %1027 = vmatprep.subr.mxu0 0.0
  %1028 = vmatpush1.msra.mxu0 0.0
  %1029 = vmatprep.subr.mxu0 0.0
  %1030 = vmatpush1.msra.mxu0 0.0
  %1031 = vmatprep.subr.mxu0 0.0
  %1032 = vmatpush1.msra.mxu0 0.0
  %1033 = vmatprep.subr.mxu0 0.0
  %1034 = vmatpush1.msra.mxu0 0.0
  %1035 = vmatprep.subr.mxu0 0.0
  %1036 = vmatpush1.msra.mxu0 0.0
  %1037 = vmatprep.subr.mxu0 0.0
  %1038 = vmatpush1.msra.mxu0 0.0
  %1039 = vmatprep.subr.mxu0 0.0
  %1040 = vmatpush1.msra.mxu0 0.0
  %1041 = vmatprep.subr.mxu0 0.0
  %1042 = vmatpush1.msra.mxu0 0.0
  %1043 = vmatprep.subr.mxu0 0.0
  %1044 = vmatpush1.msra.mxu0 0.0
  %1045 = vmatprep.subr.mxu0 0.0
  %1046 = vmatpush1.msra.mxu0 0.0
  %1047 = vmatprep.subr.mxu0 0.0
  %1048 = vmatpush1.msra.mxu0 0.0
  %1049 = vmatprep.subr.mxu0 0.0
  %1050 = vmatpush1.msra.mxu0 0.0
  %1051 = vmatprep.subr.mxu0 0.0
  %1052 = vmatpush1.msra.mxu0 0.0
  %1053 = vmatprep.subr.mxu0 0.0
  %1054 = vmatpush1.msra.mxu0 0.0
  %1055 = vmatprep.subr.mxu0 0.0
  %1056 = vmatpush1.msra.mxu0 0.0
  %1057 = vmatprep.subr.mxu0 0.0
  %1058 = vmatpush1.msra.mxu0 0.0
  %1059 = vmatprep.subr.mxu0 0.0
  %1060 = vmatpush1.msra.mxu0 0.0
  %1061 = vmatprep.subr.mxu0 0.0
  %1062 = vmatpush1.msra.mxu0 0.0
  %1063 = vmatprep.subr.mxu0 0.0
  %1064 = vmatpush1.msra.mxu0 0.0
  %1065 = vmatprep.subr.mxu0 0.0
  %1066 = vmatpush1.msra.mxu0 0.0
  %1067 = vmatprep.subr.mxu0 0.0
  %1068 = vmatpush1.msra.mxu0 0.0
  %1069 = vmatprep.subr.mxu0 0.0
  %1070 = vmatpush1.msra.mxu0 0.0
  %1071 = vmatprep.subr.mxu0 0.0
  %1072 = vmatpush1.msra.mxu0 0.0
  %1073 = vmatprep.subr.mxu0 0.0
  %1074 = vmatpush1.msra.mxu0 0.0
  %1075 = vmatprep.subr.mxu0 0.0
  %1076 = vmatpush1.msra.mxu0 0.0
  %1077 = vmatprep.subr.mxu0 0.0
  %1078 = vmatpush1.msra.mxu0 0.0
  %1079 = vmatprep.subr.mxu0 0.0
  %1080 = vmatpush1.msra.mxu0 0.0
  %1081 = vmatprep.subr.mxu0 0.0
  %1082 = vmatpush1.msra.mxu0 0.0
  %1083 = vmatprep.subr.mxu0 0.0
  %1084 = vmatpush1.msra.mxu0 0.0
  %1085 = vmatprep.subr.mxu0 0.0
  %1086 = vmatpush1.msra.mxu0 0.0
  %1087 = vmatprep.subr.mxu0 0.0
  %1088 = vmatpush1.msra.mxu0 0.0
  %1089 = vmatprep.mubr.f32.mxu0 0.0
  %1090 = vmatmul.mubr.f32.gmra.mrb[0].mxu0 %v1008
  %v1091 = vpop.f32.mrb[0].mxu0
  %v1092 = vadd.f32 0.0, %v1091
  %v1093 = vpop.f32.mrb[0].mxu0
  %v1094 = vadd.f32 0.0, %v1093
  %1095 = vmatprep.mubr.f32.mxu0 0.0
  %1096 = vmatmul.mubr.f32.gmra.mrb[0].mxu0 %v1011
  %v1097 = vpop.f32.mrb[0].mxu0
  %v1098 = vadd.f32 0.0, %v1097
  %v1099 = vpop.f32.mrb[0].mxu0
  %v1100 = vadd.f32 0.0, %v1099
  %1101 = vmatprep.mubr.f32.mxu0 0.0
  %1102 = vmatmul.mubr.f32.gmra.mrb[0].mxu0 %v1014
  %v1103 = vpop.f32.mrb[0].mxu0
  %v1104 = vadd.f32 0.0, %v1103
  %v1105 = vpop.f32.mrb[0].mxu0
  %v1106 = vadd.f32 0.0, %v1105
  %1107 = vmatprep.mubr.f32.mxu0 0.0
  %1108 = vmatmul.mubr.f32.gmra.mrb[0].mxu0 %v1017
  %v1109 = vpop.f32.mrb[0].mxu0
  %v1110 = vadd.f32 0.0, %v1109
  %v1111 = vpop.f32.mrb[0].mxu0
  %v1112 = vadd.f32 0.0, %v1111
  %1113 = vdwg.mxu0
  %v1114 = vrot.slane %v236, 4
  %v1115 = vsel %vm141, %v1114, 0
  %1117 = vmatprep.subr.mxu0 %v875
  %1118 = vmatpush1.msra.mxu0 %v873
  %1119 = vmatprep.subr.mxu0 %v881
  %1120 = vmatpush1.msra.mxu0 %v879
  %1121 = vmatprep.subr.mxu0 %v887
  %1122 = vmatpush1.msra.mxu0 %v885
  %1123 = vmatprep.subr.mxu0 %v893
  %1124 = vmatpush1.msra.mxu0 %v891
  %1125 = vmatprep.subr.mxu0 0.0
  %1126 = vmatpush1.msra.mxu0 0.0
  %1127 = vmatprep.subr.mxu0 0.0
  %1128 = vmatpush1.msra.mxu0 0.0
  %1129 = vmatprep.subr.mxu0 0.0
  %1130 = vmatpush1.msra.mxu0 0.0
  %1131 = vmatprep.subr.mxu0 0.0
  %1132 = vmatpush1.msra.mxu0 0.0
  %1133 = vmatprep.subr.mxu0 0.0
  %1134 = vmatpush1.msra.mxu0 0.0
  %1135 = vmatprep.subr.mxu0 0.0
  %1136 = vmatpush1.msra.mxu0 0.0
  %1137 = vmatprep.subr.mxu0 0.0
  %1138 = vmatpush1.msra.mxu0 0.0
  %1139 = vmatprep.subr.mxu0 0.0
  %1140 = vmatpush1.msra.mxu0 0.0
  %1141 = vmatprep.subr.mxu0 0.0
  %1142 = vmatpush1.msra.mxu0 0.0
  %1143 = vmatprep.subr.mxu0 0.0
  %1144 = vmatpush1.msra.mxu0 0.0
  %1145 = vmatprep.subr.mxu0 0.0
  %1146 = vmatpush1.msra.mxu0 0.0
  %1147 = vmatprep.subr.mxu0 0.0
  %1148 = vmatpush1.msra.mxu0 0.0
  %1149 = vmatprep.subr.mxu0 0.0
  %1150 = vmatpush1.msra.mxu0 0.0
  %1151 = vmatprep.subr.mxu0 0.0
  %1152 = vmatpush1.msra.mxu0 0.0
  %1153 = vmatprep.subr.mxu0 0.0
  %1154 = vmatpush1.msra.mxu0 0.0
  %1155 = vmatprep.subr.mxu0 0.0
  %1156 = vmatpush1.msra.mxu0 0.0
  %1157 = vmatprep.subr.mxu0 0.0
  %1158 = vmatpush1.msra.mxu0 0.0
  %1159 = vmatprep.subr.mxu0 0.0
  %1160 = vmatpush1.msra.mxu0 0.0
  %1161 = vmatprep.subr.mxu0 0.0
  %1162 = vmatpush1.msra.mxu0 0.0
  %1163 = vmatprep.subr.mxu0 0.0
  %1164 = vmatpush1.msra.mxu0 0.0
  %1165 = vmatprep.subr.mxu0 0.0
  %1166 = vmatpush1.msra.mxu0 0.0
  %1167 = vmatprep.subr.mxu0 0.0
  %1168 = vmatpush1.msra.mxu0 0.0
  %1169 = vmatprep.subr.mxu0 0.0
  %1170 = vmatpush1.msra.mxu0 0.0
  %1171 = vmatprep.subr.mxu0 0.0
  %1172 = vmatpush1.msra.mxu0 0.0
  %1173 = vmatprep.subr.mxu0 0.0
  %1174 = vmatpush1.msra.mxu0 0.0
  %1175 = vmatprep.subr.mxu0 0.0
  %1176 = vmatpush1.msra.mxu0 0.0
  %1177 = vmatprep.subr.mxu0 0.0
  %1178 = vmatpush1.msra.mxu0 0.0
  %1179 = vmatprep.subr.mxu0 0.0
  %1180 = vmatpush1.msra.mxu0 0.0
  %1181 = vmatprep.mubr.f32.mxu0 0.0
  %1182 = vmatmul.mubr.f32.gmra.mrb[0].mxu0 %v1115
  %v1183 = vpop.f32.mrb[0].mxu0
  %v1184 = vadd.f32 0.0, %v1183
  %v1185 = vpop.f32.mrb[0].mxu0
  %v1186 = vadd.f32 0.0, %v1185
  %1187 = vdwg.mxu0
  %v1188 = vsel %vm67, %v1184, -inf
  %v1189 = vrot.slane %v1188, 4
  %v1190 = vmax.f32 %v1188, %v1189
  %v1191 = vrot.slane %v1190, 2
  %v1192 = vmax.f32 %v1190, %v1191
  %v1193 = vrot.slane %v1192, 1
  %v1194 = vmax.f32 %v1192, %v1193
  %v1195 = vsel %vm67, %v1186, -inf
  %v1196 = vrot.slane %v1195, 4
  %v1197 = vmax.f32 %v1195, %v1196
  %v1198 = vrot.slane %v1197, 2
  %v1199 = vmax.f32 %v1197, %v1198
  %v1200 = vrot.slane %v1199, 1
  %v1201 = vmax.f32 %v1199, %v1200
  %v1202 = vsub.f32 %v1184, %v1194
  %v1203 = vsub.f32 %v1186, %v1201
  %v1204 = vmul.f32 %v1202, 1.442695
  %v1205 = vpow.pop %v1204
  %v1206 = vmul.f32 %v1203, 1.442695
  %v1207 = vpow.pop %v1206
  %v1208 = vsel %vm67, %v1205, 0.0
  %v1209 = vrot.slane %v1208, 4
  %v1210 = vadd.f32 %v1208, %v1209
  %v1211 = vrot.slane %v1210, 2
  %v1212 = vadd.f32 %v1210, %v1211
  %v1213 = vrot.slane %v1212, 1
  %v1214 = vadd.f32 %v1212, %v1213
  %v1215 = vsel %vm67, %v1207, 0.0
  %v1216 = vrot.slane %v1215, 4
  %v1217 = vadd.f32 %v1215, %v1216
  %v1218 = vrot.slane %v1217, 2
  %v1219 = vadd.f32 %v1217, %v1218
  %v1220 = vrot.slane %v1219, 1
  %v1221 = vadd.f32 %v1219, %v1220
  %v1222 = vrcp.pop %v1214
  %v1223 = vrcp.pop %v1221
  %v1224 = vmul.f32 %v1205, %v1222
  %v1225 = vmul.f32 %v1207, %v1223
  %1226 = vrot.lane.b32.xlu0 %v318, 124
  %v1227 = vpop.permute.xlu0 %1226
  %1228 = vrot.lane.b32.xlu0 %v323, 124
  %v1229 = vpop.permute.xlu0 %1228
  %1230 = vrot.lane.b32.xlu0 %v328, 124
  %v1231 = vpop.permute.xlu0 %1230
  %1232 = vrot.lane.b32.xlu0 %v333, 124
  %v1233 = vpop.permute.xlu0 %1232
  %v1234 = vsel %vm63, %v1227, 0
  %v1236 = vsel %vm63, %v1229, 0
  %v1238 = vsel %vm63, %v1231, 0
  %v1240 = vsel %vm63, %v1233, 0
  %v1243 = vsel %vm67, %v1224, 0
  %v1246 = vsel %vm67, %v1225, 0
  %1248 = vmatprep.subr.mxu0 %v1246
  %1249 = vmatpush1.msra.mxu0 %v1243
  %1250 = vmatprep.subr.mxu0 0.0
  %1251 = vmatpush1.msra.mxu0 0.0
  %1252 = vmatprep.subr.mxu0 0.0
  %1253 = vmatpush1.msra.mxu0 0.0
  %1254 = vmatprep.subr.mxu0 0.0
  %1255 = vmatpush1.msra.mxu0 0.0
  %1256 = vmatprep.subr.mxu0 0.0
  %1257 = vmatpush1.msra.mxu0 0.0
  %1258 = vmatprep.subr.mxu0 0.0
  %1259 = vmatpush1.msra.mxu0 0.0
  %1260 = vmatprep.subr.mxu0 0.0
  %1261 = vmatpush1.msra.mxu0 0.0
  %1262 = vmatprep.subr.mxu0 0.0
  %1263 = vmatpush1.msra.mxu0 0.0
  %1264 = vmatprep.subr.mxu0 0.0
  %1265 = vmatpush1.msra.mxu0 0.0
  %1266 = vmatprep.subr.mxu0 0.0
  %1267 = vmatpush1.msra.mxu0 0.0
  %1268 = vmatprep.subr.mxu0 0.0
  %1269 = vmatpush1.msra.mxu0 0.0
  %1270 = vmatprep.subr.mxu0 0.0
  %1271 = vmatpush1.msra.mxu0 0.0
  %1272 = vmatprep.subr.mxu0 0.0
  %1273 = vmatpush1.msra.mxu0 0.0
  %1274 = vmatprep.subr.mxu0 0.0
  %1275 = vmatpush1.msra.mxu0 0.0
  %1276 = vmatprep.subr.mxu0 0.0
  %1277 = vmatpush1.msra.mxu0 0.0
  %1278 = vmatprep.subr.mxu0 0.0
  %1279 = vmatpush1.msra.mxu0 0.0
  %1280 = vmatprep.subr.mxu0 0.0
  %1281 = vmatpush1.msra.mxu0 0.0
  %1282 = vmatprep.subr.mxu0 0.0
  %1283 = vmatpush1.msra.mxu0 0.0
  %1284 = vmatprep.subr.mxu0 0.0
  %1285 = vmatpush1.msra.mxu0 0.0
  %1286 = vmatprep.subr.mxu0 0.0
  %1287 = vmatpush1.msra.mxu0 0.0
  %1288 = vmatprep.subr.mxu0 0.0
  %1289 = vmatpush1.msra.mxu0 0.0
  %1290 = vmatprep.subr.mxu0 0.0
  %1291 = vmatpush1.msra.mxu0 0.0
  %1292 = vmatprep.subr.mxu0 0.0
  %1293 = vmatpush1.msra.mxu0 0.0
  %1294 = vmatprep.subr.mxu0 0.0
  %1295 = vmatpush1.msra.mxu0 0.0
  %1296 = vmatprep.subr.mxu0 0.0
  %1297 = vmatpush1.msra.mxu0 0.0
  %1298 = vmatprep.subr.mxu0 0.0
  %1299 = vmatpush1.msra.mxu0 0.0
  %1300 = vmatprep.subr.mxu0 0.0
  %1301 = vmatpush1.msra.mxu0 0.0
  %1302 = vmatprep.subr.mxu0 0.0
  %1303 = vmatpush1.msra.mxu0 0.0
  %1304 = vmatprep.subr.mxu0 0.0
  %1305 = vmatpush1.msra.mxu0 0.0
  %1306 = vmatprep.subr.mxu0 0.0
  %1307 = vmatpush1.msra.mxu0 0.0
  %1308 = vmatprep.subr.mxu0 0.0
  %1309 = vmatpush1.msra.mxu0 0.0
  %1310 = vmatprep.subr.mxu0 0.0
  %1311 = vmatpush1.msra.mxu0 0.0
  %1312 = vmatprep.mubr.f32.mxu0 0.0
  %1313 = vmatmul.mubr.f32.gmra.mrb[0].mxu0 %v1234
  %v1314 = vpop.f32.mrb[0].mxu0
  %v1315 = vadd.f32 0.0, %v1314
  %v1316 = vpop.f32.mrb[0].mxu0
  %v1317 = vadd.f32 0.0, %v1316
  %1318 = vmatprep.mubr.f32.mxu0 0.0
  %1319 = vmatmul.mubr.f32.gmra.mrb[0].mxu0 %v1236
  %v1320 = vpop.f32.mrb[0].mxu0
  %v1321 = vadd.f32 0.0, %v1320
  %v1322 = vpop.f32.mrb[0].mxu0
  %v1323 = vadd.f32 0.0, %v1322
  %1324 = vmatprep.mubr.f32.mxu0 0.0
  %1325 = vmatmul.mubr.f32.gmra.mrb[0].mxu0 %v1238
  %v1326 = vpop.f32.mrb[0].mxu0
  %v1327 = vadd.f32 0.0, %v1326
  %v1328 = vpop.f32.mrb[0].mxu0
  %v1329 = vadd.f32 0.0, %v1328
  %1330 = vmatprep.mubr.f32.mxu0 0.0
  %1331 = vmatmul.mubr.f32.gmra.mrb[0].mxu0 %v1240
  %v1332 = vpop.f32.mrb[0].mxu0
  %v1333 = vadd.f32 0.0, %v1332
  %v1334 = vpop.f32.mrb[0].mxu0
  %v1335 = vadd.f32 0.0, %v1334
  %1336 = vdwg.mxu0
  %v1338 = vsel %vm141, %v32, 0
  %v1341 = vsel %vm141, %v33, 0
  %v1344 = vsel %vm141, %v34, 0
  %v1347 = vsel %vm141, %v35, 0
  %1349 = vmatprep.subr.mxu0 %v1094
  %1350 = vmatpush1.msra.mxu0 %v1092
  %1351 = vmatprep.subr.mxu0 %v1100
  %1352 = vmatpush1.msra.mxu0 %v1098
  %1353 = vmatprep.subr.mxu0 %v1106
  %1354 = vmatpush1.msra.mxu0 %v1104
  %1355 = vmatprep.subr.mxu0 %v1112
  %1356 = vmatpush1.msra.mxu0 %v1110
  %1357 = vmatprep.subr.mxu0 0.0
  %1358 = vmatpush1.msra.mxu0 0.0
  %1359 = vmatprep.subr.mxu0 0.0
  %1360 = vmatpush1.msra.mxu0 0.0
  %1361 = vmatprep.subr.mxu0 0.0
  %1362 = vmatpush1.msra.mxu0 0.0
  %1363 = vmatprep.subr.mxu0 0.0
  %1364 = vmatpush1.msra.mxu0 0.0
  %1365 = vmatprep.subr.mxu0 0.0
  %1366 = vmatpush1.msra.mxu0 0.0
  %1367 = vmatprep.subr.mxu0 0.0
  %1368 = vmatpush1.msra.mxu0 0.0
  %1369 = vmatprep.subr.mxu0 0.0
  %1370 = vmatpush1.msra.mxu0 0.0
  %1371 = vmatprep.subr.mxu0 0.0
  %1372 = vmatpush1.msra.mxu0 0.0
  %1373 = vmatprep.subr.mxu0 0.0
  %1374 = vmatpush1.msra.mxu0 0.0
  %1375 = vmatprep.subr.mxu0 0.0
  %1376 = vmatpush1.msra.mxu0 0.0
  %1377 = vmatprep.subr.mxu0 0.0
  %1378 = vmatpush1.msra.mxu0 0.0
  %1379 = vmatprep.subr.mxu0 0.0
  %1380 = vmatpush1.msra.mxu0 0.0
  %1381 = vmatprep.subr.mxu0 0.0
  %1382 = vmatpush1.msra.mxu0 0.0
  %1383 = vmatprep.subr.mxu0 0.0
  %1384 = vmatpush1.msra.mxu0 0.0
  %1385 = vmatprep.subr.mxu0 0.0
  %1386 = vmatpush1.msra.mxu0 0.0
  %1387 = vmatprep.subr.mxu0 0.0
  %1388 = vmatpush1.msra.mxu0 0.0
  %1389 = vmatprep.subr.mxu0 0.0
  %1390 = vmatpush1.msra.mxu0 0.0
  %1391 = vmatprep.subr.mxu0 0.0
  %1392 = vmatpush1.msra.mxu0 0.0
  %1393 = vmatprep.subr.mxu0 0.0
  %1394 = vmatpush1.msra.mxu0 0.0
  %1395 = vmatprep.subr.mxu0 0.0
  %1396 = vmatpush1.msra.mxu0 0.0
  %1397 = vmatprep.subr.mxu0 0.0
  %1398 = vmatpush1.msra.mxu0 0.0
  %1399 = vmatprep.subr.mxu0 0.0
  %1400 = vmatpush1.msra.mxu0 0.0
  %1401 = vmatprep.subr.mxu0 0.0
  %1402 = vmatpush1.msra.mxu0 0.0
  %1403 = vmatprep.subr.mxu0 0.0
  %1404 = vmatpush1.msra.mxu0 0.0
  %1405 = vmatprep.subr.mxu0 0.0
  %1406 = vmatpush1.msra.mxu0 0.0
  %1407 = vmatprep.subr.mxu0 0.0
  %1408 = vmatpush1.msra.mxu0 0.0
  %1409 = vmatprep.subr.mxu0 0.0
  %1410 = vmatpush1.msra.mxu0 0.0
  %1411 = vmatprep.subr.mxu0 0.0
  %1412 = vmatpush1.msra.mxu0 0.0
  %1413 = vmatprep.mubr.f32.mxu0 0.0
  %1414 = vmatmul.mubr.f32.gmra.mrb[0].mxu0 %v1338
  %v1415 = vpop.f32.mrb[0].mxu0
  %v1416 = vadd.f32 0.0, %v1415
  %v1417 = vpop.f32.mrb[0].mxu0
  %v1418 = vadd.f32 0.0, %v1417
  %1419 = vmatprep.mubr.f32.mxu0 0.0
  %1420 = vmatmul.mubr.f32.gmra.mrb[0].mxu0 %v1341
  %v1421 = vpop.f32.mrb[0].mxu0
  %v1422 = vadd.f32 0.0, %v1421
  %v1423 = vpop.f32.mrb[0].mxu0
  %v1424 = vadd.f32 0.0, %v1423
  %1425 = vmatprep.mubr.f32.mxu0 0.0
  %1426 = vmatmul.mubr.f32.gmra.mrb[0].mxu0 %v1344
  %v1427 = vpop.f32.mrb[0].mxu0
  %v1428 = vadd.f32 0.0, %v1427
  %v1429 = vpop.f32.mrb[0].mxu0
  %v1430 = vadd.f32 0.0, %v1429
  %1431 = vmatprep.mubr.f32.mxu0 0.0
  %1432 = vmatmul.mubr.f32.gmra.mrb[0].mxu0 %v1347
  %v1433 = vpop.f32.mrb[0].mxu0
  %v1434 = vadd.f32 0.0, %v1433
  %v1435 = vpop.f32.mrb[0].mxu0
  %v1436 = vadd.f32 0.0, %v1435
  %1437 = vdwg.mxu0
  %1438 = vmatprep.subr.mxu0 %v1317
  %1439 = vmatpush1.msra.mxu0 %v1315
  %1440 = vmatprep.subr.mxu0 %v1323
  %1441 = vmatpush1.msra.mxu0 %v1321
  %1442 = vmatprep.subr.mxu0 %v1329
  %1443 = vmatpush1.msra.mxu0 %v1327
  %1444 = vmatprep.subr.mxu0 %v1335
  %1445 = vmatpush1.msra.mxu0 %v1333
  %1446 = vmatprep.subr.mxu0 0.0
  %1447 = vmatpush1.msra.mxu0 0.0
  %1448 = vmatprep.subr.mxu0 0.0
  %1449 = vmatpush1.msra.mxu0 0.0
  %1450 = vmatprep.subr.mxu0 0.0
  %1451 = vmatpush1.msra.mxu0 0.0
  %1452 = vmatprep.subr.mxu0 0.0
  %1453 = vmatpush1.msra.mxu0 0.0
  %1454 = vmatprep.subr.mxu0 0.0
  %1455 = vmatpush1.msra.mxu0 0.0
  %1456 = vmatprep.subr.mxu0 0.0
  %1457 = vmatpush1.msra.mxu0 0.0
  %1458 = vmatprep.subr.mxu0 0.0
  %1459 = vmatpush1.msra.mxu0 0.0
  %1460 = vmatprep.subr.mxu0 0.0
  %1461 = vmatpush1.msra.mxu0 0.0
  %1462 = vmatprep.subr.mxu0 0.0
  %1463 = vmatpush1.msra.mxu0 0.0
  %1464 = vmatprep.subr.mxu0 0.0
  %1465 = vmatpush1.msra.mxu0 0.0
  %1466 = vmatprep.subr.mxu0 0.0
  %1467 = vmatpush1.msra.mxu0 0.0
  %1468 = vmatprep.subr.mxu0 0.0
  %1469 = vmatpush1.msra.mxu0 0.0
  %1470 = vmatprep.subr.mxu0 0.0
  %1471 = vmatpush1.msra.mxu0 0.0
  %1472 = vmatprep.subr.mxu0 0.0
  %1473 = vmatpush1.msra.mxu0 0.0
  %1474 = vmatprep.subr.mxu0 0.0
  %1475 = vmatpush1.msra.mxu0 0.0
  %1476 = vmatprep.subr.mxu0 0.0
  %1477 = vmatpush1.msra.mxu0 0.0
  %1478 = vmatprep.subr.mxu0 0.0
  %1479 = vmatpush1.msra.mxu0 0.0
  %1480 = vmatprep.subr.mxu0 0.0
  %1481 = vmatpush1.msra.mxu0 0.0
  %1482 = vmatprep.subr.mxu0 0.0
  %1483 = vmatpush1.msra.mxu0 0.0
  %1484 = vmatprep.subr.mxu0 0.0
  %1485 = vmatpush1.msra.mxu0 0.0
  %1486 = vmatprep.subr.mxu0 0.0
  %1487 = vmatpush1.msra.mxu0 0.0
  %1488 = vmatprep.subr.mxu0 0.0
  %1489 = vmatpush1.msra.mxu0 0.0
  %1490 = vmatprep.subr.mxu0 0.0
  %1491 = vmatpush1.msra.mxu0 0.0
  %1492 = vmatprep.subr.mxu0 0.0
  %1493 = vmatpush1.msra.mxu0 0.0
  %1494 = vmatprep.subr.mxu0 0.0
  %1495 = vmatpush1.msra.mxu0 0.0
  %1496 = vmatprep.subr.mxu0 0.0
  %1497 = vmatpush1.msra.mxu0 0.0
  %1498 = vmatprep.subr.mxu0 0.0
  %1499 = vmatpush1.msra.mxu0 0.0
  %1500 = vmatprep.subr.mxu0 0.0
  %1501 = vmatpush1.msra.mxu0 0.0
  %1502 = vmatprep.mubr.f32.mxu0 0.0
  %1503 = vmatmul.mubr.f32.gmra.mrb[0].mxu0 %v1338
  %v1504 = vpop.f32.mrb[0].mxu0
  %v1505 = vadd.f32 0.0, %v1504
  %v1506 = vpop.f32.mrb[0].mxu0
  %v1507 = vadd.f32 0.0, %v1506
  %1508 = vmatprep.mubr.f32.mxu0 0.0
  %1509 = vmatmul.mubr.f32.gmra.mrb[0].mxu0 %v1341
  %v1510 = vpop.f32.mrb[0].mxu0
  %v1511 = vadd.f32 0.0, %v1510
  %v1512 = vpop.f32.mrb[0].mxu0
  %v1513 = vadd.f32 0.0, %v1512
  %1514 = vmatprep.mubr.f32.mxu0 0.0
  %1515 = vmatmul.mubr.f32.gmra.mrb[0].mxu0 %v1344
  %v1516 = vpop.f32.mrb[0].mxu0
  %v1517 = vadd.f32 0.0, %v1516
  %v1518 = vpop.f32.mrb[0].mxu0
  %v1519 = vadd.f32 0.0, %v1518
  %1520 = vmatprep.mubr.f32.mxu0 0.0
  %1521 = vmatmul.mubr.f32.gmra.mrb[0].mxu0 %v1347
  %v1522 = vpop.f32.mrb[0].mxu0
  %v1523 = vadd.f32 0.0, %v1522
  %v1524 = vpop.f32.mrb[0].mxu0
  %v1525 = vadd.f32 0.0, %v1524
  %1526 = vdwg.mxu0
  %v1527 = vadd.f32 %v594, %v1416
  %v1528 = vadd.f32 %v596, %v1418
  %v1529 = vadd.f32 %v683, %v1505
  %v1530 = vadd.f32 %v685, %v1507
  %v1531 = vadd.f32 %v600, %v1422
  %v1532 = vadd.f32 %v602, %v1424
  %v1533 = vadd.f32 %v689, %v1511
  %v1534 = vadd.f32 %v691, %v1513
  %v1535 = vadd.f32 %v606, %v1428
  %v1536 = vadd.f32 %v608, %v1430
  %v1537 = vadd.f32 %v695, %v1517
  %v1538 = vadd.f32 %v697, %v1519
  %v1539 = vadd.f32 %v612, %v1434
  %v1540 = vadd.f32 %v614, %v1436
  %v1541 = vadd.f32 %v701, %v1523
  %v1542 = vadd.f32 %v703, %v1525
  %1544 = vset.pattern.permute.xlu0 0
  %1545 = vperm.xlu0 %1544, %v53
  %v1546 = vpop.permute.xlu0 %1545
  %v1549 = vsel %vm141, %v52, 0
  %1551 = vmatprep.subr.mxu0 %v1528
  %1552 = vmatpush1.msra.mxu0 %v1527
  %1553 = vmatprep.subr.mxu0 %v1532
  %1554 = vmatpush1.msra.mxu0 %v1531
  %1555 = vmatprep.subr.mxu0 %v1536
  %1556 = vmatpush1.msra.mxu0 %v1535
  %1557 = vmatprep.subr.mxu0 %v1540
  %1558 = vmatpush1.msra.mxu0 %v1539
  %1559 = vmatprep.subr.mxu0 0.0
  %1560 = vmatpush1.msra.mxu0 0.0
  %1561 = vmatprep.subr.mxu0 0.0
  %1562 = vmatpush1.msra.mxu0 0.0
  %1563 = vmatprep.subr.mxu0 0.0
  %1564 = vmatpush1.msra.mxu0 0.0
  %1565 = vmatprep.subr.mxu0 0.0
  %1566 = vmatpush1.msra.mxu0 0.0
  %1567 = vmatprep.subr.mxu0 0.0
  %1568 = vmatpush1.msra.mxu0 0.0
  %1569 = vmatprep.subr.mxu0 0.0
  %1570 = vmatpush1.msra.mxu0 0.0
  %1571 = vmatprep.subr.mxu0 0.0
  %1572 = vmatpush1.msra.mxu0 0.0
  %1573 = vmatprep.subr.mxu0 0.0
  %1574 = vmatpush1.msra.mxu0 0.0
  %1575 = vmatprep.subr.mxu0 0.0
  %1576 = vmatpush1.msra.mxu0 0.0
  %1577 = vmatprep.subr.mxu0 0.0
  %1578 = vmatpush1.msra.mxu0 0.0
  %1579 = vmatprep.subr.mxu0 0.0
  %1580 = vmatpush1.msra.mxu0 0.0
  %1581 = vmatprep.subr.mxu0 0.0
  %1582 = vmatpush1.msra.mxu0 0.0
  %1583 = vmatprep.subr.mxu0 0.0
  %1584 = vmatpush1.msra.mxu0 0.0
  %1585 = vmatprep.subr.mxu0 0.0
  %1586 = vmatpush1.msra.mxu0 0.0
  %1587 = vmatprep.subr.mxu0 0.0
  %1588 = vmatpush1.msra.mxu0 0.0
  %1589 = vmatprep.subr.mxu0 0.0
  %1590 = vmatpush1.msra.mxu0 0.0
  %1591 = vmatprep.subr.mxu0 0.0
  %1592 = vmatpush1.msra.mxu0 0.0
  %1593 = vmatprep.subr.mxu0 0.0
  %1594 = vmatpush1.msra.mxu0 0.0
  %1595 = vmatprep.subr.mxu0 0.0
  %1596 = vmatpush1.msra.mxu0 0.0
  %1597 = vmatprep.subr.mxu0 0.0
  %1598 = vmatpush1.msra.mxu0 0.0
  %1599 = vmatprep.subr.mxu0 0.0
  %1600 = vmatpush1.msra.mxu0 0.0
  %1601 = vmatprep.subr.mxu0 0.0
  %1602 = vmatpush1.msra.mxu0 0.0
  %1603 = vmatprep.subr.mxu0 0.0
  %1604 = vmatpush1.msra.mxu0 0.0
  %1605 = vmatprep.subr.mxu0 0.0
  %1606 = vmatpush1.msra.mxu0 0.0
  %1607 = vmatprep.subr.mxu0 0.0
  %1608 = vmatpush1.msra.mxu0 0.0
  %1609 = vmatprep.subr.mxu0 0.0
  %1610 = vmatpush1.msra.mxu0 0.0
  %1611 = vmatprep.subr.mxu0 0.0
  %1612 = vmatpush1.msra.mxu0 0.0
  %1613 = vmatprep.subr.mxu0 0.0
  %1614 = vmatpush1.msra.mxu0 0.0
  %1615 = vmatprep.mubr.f32.mxu0 0.0
  %1616 = vmatmul.mubr.f32.gmra.mrb[0].mxu0 %v1549
  %v1617 = vpop.f32.mrb[0].mxu0
  %v1618 = vadd.f32 %v1546, %v1617
  %v1619 = vpop.f32.mrb[0].mxu0
  %v1620 = vadd.f32 %v1546, %v1619
  %1621 = vdwg.mxu0
  %1622 = vmatprep.subr.mxu0 %v1530
  %1623 = vmatpush1.msra.mxu0 %v1529
  %1624 = vmatprep.subr.mxu0 %v1534
  %1625 = vmatpush1.msra.mxu0 %v1533
  %1626 = vmatprep.subr.mxu0 %v1538
  %1627 = vmatpush1.msra.mxu0 %v1537
  %1628 = vmatprep.subr.mxu0 %v1542
  %1629 = vmatpush1.msra.mxu0 %v1541
  %1630 = vmatprep.subr.mxu0 0.0
  %1631 = vmatpush1.msra.mxu0 0.0
  %1632 = vmatprep.subr.mxu0 0.0
  %1633 = vmatpush1.msra.mxu0 0.0
  %1634 = vmatprep.subr.mxu0 0.0
  %1635 = vmatpush1.msra.mxu0 0.0
  %1636 = vmatprep.subr.mxu0 0.0
  %1637 = vmatpush1.msra.mxu0 0.0
  %1638 = vmatprep.subr.mxu0 0.0
  %1639 = vmatpush1.msra.mxu0 0.0
  %1640 = vmatprep.subr.mxu0 0.0
  %1641 = vmatpush1.msra.mxu0 0.0
  %1642 = vmatprep.subr.mxu0 0.0
  %1643 = vmatpush1.msra.mxu0 0.0
  %1644 = vmatprep.subr.mxu0 0.0
  %1645 = vmatpush1.msra.mxu0 0.0
  %1646 = vmatprep.subr.mxu0 0.0
  %1647 = vmatpush1.msra.mxu0 0.0
  %1648 = vmatprep.subr.mxu0 0.0
  %1649 = vmatpush1.msra.mxu0 0.0
  %1650 = vmatprep.subr.mxu0 0.0
  %1651 = vmatpush1.msra.mxu0 0.0
  %1652 = vmatprep.subr.mxu0 0.0
  %1653 = vmatpush1.msra.mxu0 0.0
  %1654 = vmatprep.subr.mxu0 0.0
  %1655 = vmatpush1.msra.mxu0 0.0
  %1656 = vmatprep.subr.mxu0 0.0
  %1657 = vmatpush1.msra.mxu0 0.0
  %1658 = vmatprep.subr.mxu0 0.0
  %1659 = vmatpush1.msra.mxu0 0.0
  %1660 = vmatprep.subr.mxu0 0.0
  %1661 = vmatpush1.msra.mxu0 0.0
  %1662 = vmatprep.subr.mxu0 0.0
  %1663 = vmatpush1.msra.mxu0 0.0
  %1664 = vmatprep.subr.mxu0 0.0
  %1665 = vmatpush1.msra.mxu0 0.0
  %1666 = vmatprep.subr.mxu0 0.0
  %1667 = vmatpush1.msra.mxu0 0.0
  %1668 = vmatprep.subr.mxu0 0.0
  %1669 = vmatpush1.msra.mxu0 0.0
  %1670 = vmatprep.subr.mxu0 0.0
  %1671 = vmatpush1.msra.mxu0 0.0
  %1672 = vmatprep.subr.mxu0 0.0
  %1673 = vmatpush1.msra.mxu0 0.0
  %1674 = vmatprep.subr.mxu0 0.0
  %1675 = vmatpush1.msra.mxu0 0.0
  %1676 = vmatprep.subr.mxu0 0.0
  %1677 = vmatpush1.msra.mxu0 0.0
  %1678 = vmatprep.subr.mxu0 0.0
  %1679 = vmatpush1.msra.mxu0 0.0
  %1680 = vmatprep.subr.mxu0 0.0
  %1681 = vmatpush1.msra.mxu0 0.0
  %1682 = vmatprep.subr.mxu0 0.0
  %1683 = vmatpush1.msra.mxu0 0.0
  %1684 = vmatprep.subr.mxu0 0.0
  %1685 = vmatpush1.msra.mxu0 0.0
  %1686 = vmatprep.mubr.f32.mxu0 0.0
  %1687 = vmatmul.mubr.f32.gmra.mrb[0].mxu0 %v1549
  %v1688 = vpop.f32.mrb[0].mxu0
  %v1689 = vadd.f32 %v1546, %v1688
  %v1690 = vpop.f32.mrb[0].mxu0
  %v1691 = vadd.f32 %v1546, %v1690
  %1692 = vdwg.mxu0
  %v1695 = vrot.slane %v1689, 4
  %v1696 = vrot.slane %v1691, 4
  %v1699 = vsel %vm67, %v1618, %v1695
  %v1700 = vsel %vm67, %v1620, %v1696
  %1701 = vst [vmem:[%s2] sm:$0xff] %v1699
  %1702 = vst [vmem:[%s2 + $0x8] sm:$0xff] %v1700
  // Predicated region
  $region10: #{ip_adapter_forward.1} parent=0 // pred_check
    _
  $region11: #{ip_adapter_forward.1} parent=0 // pred_check_branch
    %1704 = sbr.rel (0) target = $region13
  $region12: #{ip_adapter_forward.1} parent=0 // pred_region
    _
  $region13: #{ip_adapter_forward.1} parent=0 // pred_fallthru
    _
  // Predicated region
  $region14: #{ip_adapter_forward.1} parent=0 // pred_check
    _
  $region15: #{ip_adapter_forward.1} parent=0 // pred_check_branch
    %1706 = sbr.rel (0) target = $region17
  $region16: #{ip_adapter_forward.1} parent=0 // pred_region
    _
  $region17: #{ip_adapter_forward.1} parent=0 // pred_fallthru
    _

</llo_original>
